<compile_context>
chip_gen: v6e
topology: v6e:2x2x1
jax: 0.10.0
libtpu: 0.0.40
codegen_flags: <defaults>
</compile_context>

<pallas_src>
import functools

import jax
import jax.numpy as jnp
from jax.experimental import pallas as pl
from jax.experimental.pallas import tpu as pltpu


def _mlp_kernel(x_ref, w1_ref, b1_ref, w2_ref, b2_ref, o_ref):
    # fc1 on the MXU: bf16 x bf16 -> f32 accumulate.
    h = jnp.dot(x_ref[...], w1_ref[...], preferred_element_type=jnp.float32)
    # Bias + ReLU in f32 on the VPU (bias (1, H) broadcasts over rows).
    h = jnp.maximum(h + b1_ref[...], 0.0)
    # fc2: cast activations to bf16 for the MXU, accumulate in f32.
    y = jnp.dot(h.astype(w2_ref.dtype), w2_ref[...],
                preferred_element_type=jnp.float32)
    o_ref[...] = (y + b2_ref[...]).astype(o_ref.dtype)


def _round_up(n, m):
    return ((n + m - 1) // m) * m


@functools.partial(jax.jit, static_argnames=("batch_tile",))
def mlp_forward(x, w1_t, b1, w2_t, b2, *, batch_tile=256):
    """Fused MLP forward: ReLU(x @ w1_t + b1) @ w2_t + b2.

    x      : any shape flattening to (B, input_dim)  (PyTorch x.view(-1, input_dim))
    w1_t   : (input_dim, hidden)   pre-transposed fc1 weight
    b1     : (hidden,)
    w2_t   : (hidden, num_labels)  pre-transposed fc2 weight
    b2     : (num_labels,)
    Returns f32 logits of shape (B, num_labels).
    """
    input_dim = w1_t.shape[0]
    hidden = w1_t.shape[1]
    num_labels = w2_t.shape[1]

    x2 = x.reshape(-1, input_dim)           # == x.view(-1, input_dim)
    B = x2.shape[0]

    # Lane-align hidden / output dims. Zero padding is semantics-preserving:
    # padded hidden cols get 0 weight + 0 bias -> ReLU(0) = 0 -> contribute 0,
    # padded logit cols are sliced off below.
    H_pad = _round_up(hidden, 128)           # 397 -> 512
    L_pad = _round_up(num_labels, 128)       # 10  -> 128

    # Batch tiling: big row tiles for MXU occupancy; pad B up to a tile multiple.
    tb = batch_tile if B >= batch_tile else _round_up(B, 8)
    B_pad = _round_up(B, tb)
    nb = B_pad // tb

    # bf16 matmul inputs (f32 accumulation on the MXU), f32 biases.
    xp = jnp.zeros((B_pad, input_dim), jnp.bfloat16).at[:B].set(
        x2.astype(jnp.bfloat16))
    w1p = jnp.zeros((input_dim, H_pad), jnp.bfloat16).at[:, :hidden].set(
        w1_t.astype(jnp.bfloat16))
    w2p = jnp.zeros((H_pad, L_pad), jnp.bfloat16).at[:hidden, :num_labels].set(
        w2_t.astype(jnp.bfloat16))
    b1p = jnp.zeros((1, H_pad), jnp.float32).at[:, :hidden].set(b1[None, :])
    b2p = jnp.zeros((1, L_pad), jnp.float32).at[:, :num_labels].set(b2[None, :])

    out = pl.pallas_call(
        _mlp_kernel,
        out_shape=jax.ShapeDtypeStruct((B_pad, L_pad), jnp.float32),
        grid_spec=pltpu.PrefetchScalarGridSpec(
            num_scalar_prefetch=0,
            grid=(nb,),
            in_specs=[
                # x: one (tb, input_dim) batch tile per grid step.
                pl.BlockSpec((tb, input_dim), lambda i: (i, 0)),
                # Weights / biases: constant block index -> DMA'd once,
                # resident in VMEM across all batch tiles.
                pl.BlockSpec((input_dim, H_pad), lambda i: (0, 0)),
                pl.BlockSpec((1, H_pad), lambda i: (0, 0)),
                pl.BlockSpec((H_pad, L_pad), lambda i: (0, 0)),
                pl.BlockSpec((1, L_pad), lambda i: (0, 0)),
            ],
            out_specs=pl.BlockSpec((tb, L_pad), lambda i: (i, 0)),
        ),
        compiler_params=pltpu.CompilerParams(
            dimension_semantics=("parallel",),
            vmem_limit_bytes=16 << 20,
        ),
    )(xp, w1p, b1p, w2p, b2p)

    return out[:B, :num_labels]


def init_linear_params(key, in_features, out_features):
    """Deterministic init mimicking PyTorch nn.Linear defaults
    (uniform(-1/sqrt(fan_in), 1/sqrt(fan_in)) for both weight and bias).
    Weight is stored pre-transposed as (in_features, out_features)."""
    kw, kb = jax.random.split(key)
    bound = 1.0 / jnp.sqrt(float(in_features))
    w_t = jax.random.uniform(kw, (in_features, out_features),
                             jnp.float32, -bound, bound)
    b = jax.random.uniform(kb, (out_features,), jnp.float32, -bound, bound)
    return w_t, b


if __name__ == "__main__":
    # Module config (PyTorch defaults): input_dim=784, hidden=(784+10)//2=397, labels=10
    input_dim = 784
    num_labels = 10
    hidden_dim = (input_dim + num_labels) // 2   # 397

    key = jax.random.PRNGKey(0)
    k_x, k_fc1, k_fc2 = jax.random.split(key, 3)

    # Small MNIST-like batch; batch_tile=128 -> two grid steps exercised.
    B = 256
    x_img = jax.random.normal(k_x, (B, 1, 28, 28), jnp.float32)

    w1_t, b1 = init_linear_params(k_fc1, input_dim, hidden_dim)
    w2_t, b2 = init_linear_params(k_fc2, hidden_dim, num_labels)

    y_hat = mlp_forward(x_img, w1_t, b1, w2_t, b2, batch_tile=128)
    y_hat = jax.block_until_ready(y_hat)

    # Sanity check against plain-JAX f32 reference (kernel uses bf16 matmul
    # inputs with f32 accumulation, so the tolerance is relaxed accordingly).
    x_flat = x_img.reshape(-1, input_dim)
    ref = jnp.maximum(x_flat @ w1_t + b1, 0.0) @ w2_t + b2
    assert y_hat.shape == (B, num_labels)
    assert jnp.allclose(y_hat, ref, atol=5e-2, rtol=5e-2), (
        float(jnp.max(jnp.abs(y_hat - ref))))

    print("KERNEL_OK")
</pallas_src>

<mosaic_0001>
module attributes {stable_mosaic.version = 11 : i64} {
  func.func @_mlp_kernel(%arg0: i32, %arg1: memref<128x784xbf16, #tpu.memory_space<vmem>>, %arg2: memref<784x512xbf16, #tpu.memory_space<vmem>>, %arg3: memref<1x512xf32, #tpu.memory_space<vmem>>, %arg4: memref<512x128xbf16, #tpu.memory_space<vmem>>, %arg5: memref<1x128xf32, #tpu.memory_space<vmem>>, %arg6: memref<128x128xf32, #tpu.memory_space<vmem>>) attributes {dimension_semantics = [#tpu.dimension_semantics<parallel>], iteration_bounds = array<i64: 2>, scalar_prefetch = 0 : i64, scratch_operands = 0 : i64, tpu.core_type = #tpu.core_type<tc>, window_params = [{transform_indices = @transform_0, window_bounds = array<i64: 128, 784>}, {pipeline_mode = #tpu.pipeline_mode<synchronous>, transform_indices = @transform_1, window_bounds = array<i64: 784, 512>}, {pipeline_mode = #tpu.pipeline_mode<synchronous>, transform_indices = @transform_2, window_bounds = array<i64: 1, 512>}, {pipeline_mode = #tpu.pipeline_mode<synchronous>, transform_indices = @transform_3, window_bounds = array<i64: 512, 128>}, {pipeline_mode = #tpu.pipeline_mode<synchronous>, transform_indices = @transform_4, window_bounds = array<i64: 1, 128>}, {transform_indices = @transform_5, window_bounds = array<i64: 128, 128>}]} {
    %c0 = arith.constant 0 : index
    %c0_0 = arith.constant 0 : index
    %0 = vector.load %arg1[%c0, %c0_0] : memref<128x784xbf16, #tpu.memory_space<vmem>>, vector<128x784xbf16>
    %c0_1 = arith.constant 0 : index
    %c0_2 = arith.constant 0 : index
    %1 = vector.load %arg2[%c0_1, %c0_2] : memref<784x512xbf16, #tpu.memory_space<vmem>>, vector<784x512xbf16>
    %cst = arith.constant dense<0.000000e+00> : vector<128x512xf32>
    %2 = tpu.matmul %0, %1, %cst {dimension_numbers = #tpu.dot_dimension_numbers<[1], [0], [0], [1], [0, 0, 1, 1], [], []>} : vector<128x784xbf16>, vector<784x512xbf16>, vector<128x512xf32> -> vector<128x512xf32>
    %c0_3 = arith.constant 0 : index
    %c0_4 = arith.constant 0 : index
    %3 = vector.load %arg3[%c0_3, %c0_4] : memref<1x512xf32, #tpu.memory_space<vmem>>, vector<1x512xf32>
    %4 = vector.broadcast %3 : vector<1x512xf32> to vector<128x512xf32>
    %5 = arith.addf %2, %4 : vector<128x512xf32>
    %cst_5 = arith.constant 0.000000e+00 : f32
    %6 = vector.broadcast %cst_5 : f32 to vector<128x512xf32>
    %7 = arith.maximumf %5, %6 : vector<128x512xf32>
    %8 = arith.truncf %7 : vector<128x512xf32> to vector<128x512xbf16>
    %c0_6 = arith.constant 0 : index
    %c0_7 = arith.constant 0 : index
    %9 = vector.load %arg4[%c0_6, %c0_7] : memref<512x128xbf16, #tpu.memory_space<vmem>>, vector<512x128xbf16>
    %cst_8 = arith.constant dense<0.000000e+00> : vector<128x128xf32>
    %10 = tpu.matmul %8, %9, %cst_8 {dimension_numbers = #tpu.dot_dimension_numbers<[1], [0], [0], [1], [0, 0, 1, 1], [], []>} : vector<128x512xbf16>, vector<512x128xbf16>, vector<128x128xf32> -> vector<128x128xf32>
    %c0_9 = arith.constant 0 : index
    %c0_10 = arith.constant 0 : index
    %11 = vector.load %arg5[%c0_9, %c0_10] : memref<1x128xf32, #tpu.memory_space<vmem>>, vector<1x128xf32>
    %12 = vector.broadcast %11 : vector<1x128xf32> to vector<128x128xf32>
    %13 = arith.addf %10, %12 : vector<128x128xf32>
    %c0_11 = arith.constant 0 : index
    %c0_12 = arith.constant 0 : index
    %14 = vector.load %arg6[%c0_11, %c0_12] : memref<128x128xf32, #tpu.memory_space<vmem>>, vector<128x128xf32>
    tpu.vector_store %arg6[%c0_11, %c0_12], %13 {strides = array<i32>} : memref<128x128xf32, #tpu.memory_space<vmem>>, vector<128x128xf32>,
    return
  }
  func.func @transform_0(%arg0: i32) -> (i32, i32) {
    %c0_i32 = arith.constant 0 : i32
    %c0_i32_0 = arith.constant 0 : i32
    return %arg0, %c0_i32 : i32, i32
  }
  func.func @transform_1(%arg0: i32) -> (i32, i32) {
    %c0_i32 = arith.constant 0 : i32
    %c0_i32_0 = arith.constant 0 : i32
    %c0_i32_1 = arith.constant 0 : i32
    return %c0_i32, %c0_i32_0 : i32, i32
  }
  func.func @transform_2(%arg0: i32) -> (i32, i32) {
    %c0_i32 = arith.constant 0 : i32
    %c0_i32_0 = arith.constant 0 : i32
    %c0_i32_1 = arith.constant 0 : i32
    return %c0_i32, %c0_i32_0 : i32, i32
  }
  func.func @transform_3(%arg0: i32) -> (i32, i32) {
    %c0_i32 = arith.constant 0 : i32
    %c0_i32_0 = arith.constant 0 : i32
    %c0_i32_1 = arith.constant 0 : i32
    return %c0_i32, %c0_i32_0 : i32, i32
  }
  func.func @transform_4(%arg0: i32) -> (i32, i32) {
    %c0_i32 = arith.constant 0 : i32
    %c0_i32_0 = arith.constant 0 : i32
    %c0_i32_1 = arith.constant 0 : i32
    return %c0_i32, %c0_i32_0 : i32, i32
  }
  func.func @transform_5(%arg0: i32) -> (i32, i32) {
    %c0_i32 = arith.constant 0 : i32
    %c0_i32_0 = arith.constant 0 : i32
    return %arg0, %c0_i32 : i32, i32
  }
}

</mosaic_0001>

<llo_original>
// kernel: mlp_forward.1
$region0: #{mlp_forward.1}
  #allocation0 [shape = 'u32[]', space=smem, size = 0x4, offset = 0x4, fixed_abs, tag = 'smem constant byte address 0x4 - core index']
  #allocation1 [shape = 'u32[144,128]{1,0:T(1,128)}', space=vmem, size = 0x12000, scoped, tag = 'internal scratch']
  %s0 = inlined_call_operand.vmem [shape: bf16[256,784], index: 0, kind: input, shape index: {}]
  %s1 = inlined_call_operand.vmem [shape: bf16[784,512], index: 1, kind: input, shape index: {}]
  %s2 = inlined_call_operand.vmem [shape: f32[1,512], index: 2, kind: input, shape index: {}]
  %s3 = inlined_call_operand.vmem [shape: bf16[512,128], index: 3, kind: input, shape index: {}]
  %s4 = inlined_call_operand.vmem [shape: f32[1,128], index: 4, kind: input, shape index: {}]
  %s5 = inlined_call_operand.vmem [shape: f32[256,128], index: 5, kind: output, shape index: {}]
  %s6 = sld [smem:[#allocation0]]
  $region53: #{mlp_forward.1} parent=0
    _
  %s8 = ssub.s32 1, %s6
  %s9 = scalar_select 0, %s8, %s6
  loop: start=0, step=1, limit=4
  $region2: #{mlp_forward.1} parent=0 // loop_pre_header
    _
  $region3: #{mlp_forward.1} parent=0 // loop_header
    %s11 = sphi 0, %s15
    %p12 = scmp.ge.s32.totalorder %s11, 4
    %s21 = sphi 0, %s23
    %s24 = sphi 0, %s21
    %s25 = sphi 0, %s24
    %s41 = sphi 0, %s25
    %s45 = sphi 0, %s45
    %s47 = sphi 0, %s45
    %s48 = sphi 0, %s47
    %s62 = sphi 0, %s48
    %s66 = sphi 0, %s66
    %s68 = sphi 0, %s66
    %s69 = sphi 0, %s68
    %s83 = sphi 0, %s69
    %s87 = sphi 0, %s87
    %s89 = sphi 0, %s87
    %s90 = sphi 0, %s89
    %s104 = sphi 0, %s90
    %s108 = sphi 0, %s108
    %s110 = sphi 0, %s108
    %s111 = sphi 0, %s110
    %s125 = sphi 0, %s111
    %s131 = sphi 0, %s133
    %s134 = sphi 0, %s131
    %s135 = sphi 0, %s134
    %s151 = sphi 0, %s135
  $region4: #{mlp_forward.1} parent=0 // loop_header_branch
    %14 = sbr.rel (%p12) target = $region8
  $region5: #{mlp_forward.1} parent=0 // loop_body
    %s16 = ssub.s32 %s11, 1
    %s17 = ssub.s32 %s11, 2
    %s18 = sadd.s32 %s11, 1
    %s19 = ssub.s32 %s11, %s18
    %p20 = scmp.eq.s32.totalorder %s19, 0
    %s22 = sadd.s32 %s21, 1
    %s23 = scalar_select %p20, %s21, %s22
    %p26 = pneg %p20
    %p27 = scmp.eq.s32.totalorder %s11, 1
    %p28 = por %p26, %p27
    %p29 = scmp.ne.s32.totalorder %s21, %s24
    %p30 = scmp.eq.s32.totalorder %s11, 0
    %p31 = por %p29, %p30
    %p32 = scmp.ne.s32.totalorder %s21, %s24
    %p33 = scmp.eq.s32.totalorder %s16, 1
    %p34 = por %p32, %p33
    %p35 = scmp.ne.s32.totalorder %s24, %s25
    %p36 = scmp.eq.s32.totalorder %s16, 0
    %p37 = por %p35, %p36
    %p38 = scmp.ne.s32.totalorder %s24, %s25
    %p39 = scmp.eq.s32.totalorder %s17, 1
    %p40 = por %p38, %p39
    %p42 = scmp.ne.s32.totalorder %s25, %s41
    %p43 = scmp.eq.s32.totalorder %s17, 0
    %p44 = por %p42, %p43
    %s46 = sadd.s32 %s45, 1
    %p49 = scmp.eq.s32.totalorder %s11, 1
    %p50 = scmp.ne.s32.totalorder %s45, %s47
    %p51 = scmp.eq.s32.totalorder %s11, 0
    %p52 = por %p50, %p51
    %p53 = scmp.ne.s32.totalorder %s45, %s47
    %p54 = scmp.eq.s32.totalorder %s16, 1
    %p55 = por %p53, %p54
    %p56 = scmp.ne.s32.totalorder %s47, %s48
    %p57 = scmp.eq.s32.totalorder %s16, 0
    %p58 = por %p56, %p57
    %p59 = scmp.ne.s32.totalorder %s47, %s48
    %p60 = scmp.eq.s32.totalorder %s17, 1
    %p61 = por %p59, %p60
    %p63 = scmp.ne.s32.totalorder %s48, %s62
    %p64 = scmp.eq.s32.totalorder %s17, 0
    %p65 = por %p63, %p64
    %s67 = sadd.s32 %s66, 1
    %p70 = scmp.eq.s32.totalorder %s11, 1
    %p71 = scmp.ne.s32.totalorder %s66, %s68
    %p72 = scmp.eq.s32.totalorder %s11, 0
    %p73 = por %p71, %p72
    %p74 = scmp.ne.s32.totalorder %s66, %s68
    %p75 = scmp.eq.s32.totalorder %s16, 1
    %p76 = por %p74, %p75
    %p77 = scmp.ne.s32.totalorder %s68, %s69
    %p78 = scmp.eq.s32.totalorder %s16, 0
    %p79 = por %p77, %p78
    %p80 = scmp.ne.s32.totalorder %s68, %s69
    %p81 = scmp.eq.s32.totalorder %s17, 1
    %p82 = por %p80, %p81
    %p84 = scmp.ne.s32.totalorder %s69, %s83
    %p85 = scmp.eq.s32.totalorder %s17, 0
    %p86 = por %p84, %p85
    %s88 = sadd.s32 %s87, 1
    %p91 = scmp.eq.s32.totalorder %s11, 1
    %p92 = scmp.ne.s32.totalorder %s87, %s89
    %p93 = scmp.eq.s32.totalorder %s11, 0
    %p94 = por %p92, %p93
    %p95 = scmp.ne.s32.totalorder %s87, %s89
    %p96 = scmp.eq.s32.totalorder %s16, 1
    %p97 = por %p95, %p96
    %p98 = scmp.ne.s32.totalorder %s89, %s90
    %p99 = scmp.eq.s32.totalorder %s16, 0
    %p100 = por %p98, %p99
    %p101 = scmp.ne.s32.totalorder %s89, %s90
    %p102 = scmp.eq.s32.totalorder %s17, 1
    %p103 = por %p101, %p102
    %p105 = scmp.ne.s32.totalorder %s90, %s104
    %p106 = scmp.eq.s32.totalorder %s17, 0
    %p107 = por %p105, %p106
    %s109 = sadd.s32 %s108, 1
    %p112 = scmp.eq.s32.totalorder %s11, 1
    %p113 = scmp.ne.s32.totalorder %s108, %s110
    %p114 = scmp.eq.s32.totalorder %s11, 0
    %p115 = por %p113, %p114
    %p116 = scmp.ne.s32.totalorder %s108, %s110
    %p117 = scmp.eq.s32.totalorder %s16, 1
    %p118 = por %p116, %p117
    %p119 = scmp.ne.s32.totalorder %s110, %s111
    %p120 = scmp.eq.s32.totalorder %s16, 0
    %p121 = por %p119, %p120
    %p122 = scmp.ne.s32.totalorder %s110, %s111
    %p123 = scmp.eq.s32.totalorder %s17, 1
    %p124 = por %p122, %p123
    %p126 = scmp.ne.s32.totalorder %s111, %s125
    %p127 = scmp.eq.s32.totalorder %s17, 0
    %p128 = por %p126, %p127
    %s129 = ssub.s32 %s11, %s18
    %p130 = scmp.eq.s32.totalorder %s129, 0
    %s132 = sadd.s32 %s131, 1
    %s133 = scalar_select %p130, %s131, %s132
    %p136 = pneg %p130
    %p137 = scmp.eq.s32.totalorder %s11, 1
    %p138 = por %p136, %p137
    %p139 = scmp.ne.s32.totalorder %s131, %s134
    %p140 = scmp.eq.s32.totalorder %s11, 0
    %p141 = por %p139, %p140
    %p142 = scmp.ne.s32.totalorder %s131, %s134
    %p143 = scmp.eq.s32.totalorder %s16, 1
    %p144 = por %p142, %p143
    %p145 = scmp.ne.s32.totalorder %s134, %s135
    %p146 = scmp.eq.s32.totalorder %s16, 0
    %p147 = por %p145, %p146
    %p148 = scmp.ne.s32.totalorder %s134, %s135
    %p149 = scmp.eq.s32.totalorder %s17, 1
    %p150 = por %p148, %p149
    %p152 = scmp.ne.s32.totalorder %s135, %s151
    %p153 = scmp.eq.s32.totalorder %s17, 0
    %p154 = por %p152, %p153
    %p155 = scmp.le.s32.totalorder 1, %s11
    %p156 = scmp.lt.s32.totalorder %s11, 3
    %p157 = pnand %p155, %p156
    %p158 = pneg %p157
    // Predicated region
    $region9: #{mlp_forward.1} parent=5 // pred_check
      _
    $region10: #{mlp_forward.1} parent=5 // pred_check_branch
      %160 = sbr.rel (%p157) target = $region12
    $region11: #{mlp_forward.1} parent=5 // pred_region
      %s161 = ssub.s32 %s11, 1
      // Predicated region
      $region13: #{mlp_forward.1} parent=11 // pred_check
        %p162 = pneg %p58
      $region14: #{mlp_forward.1} parent=11 // pred_check_branch
        %164 = sbr.rel (%p162) target = $region16
      $region15: #{mlp_forward.1} parent=11 // pred_region
        _
      $region16: #{mlp_forward.1} parent=11 // pred_fallthru
        _
      // Predicated region
      $region17: #{mlp_forward.1} parent=11 // pred_check
        %p165 = pneg %p79
      $region18: #{mlp_forward.1} parent=11 // pred_check_branch
        %167 = sbr.rel (%p165) target = $region20
      $region19: #{mlp_forward.1} parent=11 // pred_region
        _
      $region20: #{mlp_forward.1} parent=11 // pred_fallthru
        _
      // Predicated region
      $region21: #{mlp_forward.1} parent=11 // pred_check
        %p168 = pneg %p100
      $region22: #{mlp_forward.1} parent=11 // pred_check_branch
        %170 = sbr.rel (%p168) target = $region24
      $region23: #{mlp_forward.1} parent=11 // pred_region
        _
      $region24: #{mlp_forward.1} parent=11 // pred_fallthru
        _
      // Predicated region
      $region25: #{mlp_forward.1} parent=11 // pred_check
        %p171 = pneg %p121
      $region26: #{mlp_forward.1} parent=11 // pred_check_branch
        %173 = sbr.rel (%p171) target = $region28
      $region27: #{mlp_forward.1} parent=11 // pred_region
        _
      $region28: #{mlp_forward.1} parent=11 // pred_fallthru
        _
    $region12: #{mlp_forward.1} parent=5 // pred_fallthru
      _
    %p174 = scmp.lt.s32.totalorder %s11, 2
    // Predicated region
    $region29: #{mlp_forward.1} parent=5 // pred_check
      %p175 = pneg %p174
    $region30: #{mlp_forward.1} parent=5 // pred_check_branch
      %177 = sbr.rel (%p175) target = $region32
    $region31: #{mlp_forward.1} parent=5 // pred_region
      // Predicated region
      $region33: #{mlp_forward.1} parent=31 // pred_check
        %p178 = pneg %p31
      $region34: #{mlp_forward.1} parent=31 // pred_check_branch
        %180 = sbr.rel (%p178) target = $region36
      $region35: #{mlp_forward.1} parent=31 // pred_region
        %s181 = smul.u32 16, %s11
        %p182 = scmp.lt.s32.totalorder %s181, 31
        %s183 = scalar_select %p182, %s181, 31
        %s184 = smul.addr %s183, 7
        %s185 = smul.addr %s184, 4
        %s186 = scalar_lea.vmem %s0, %s185
        %s187 = smul.u32 16, %s11
      $region36: #{mlp_forward.1} parent=31 // pred_fallthru
        _
    $region32: #{mlp_forward.1} parent=5 // pred_fallthru
      _
    %p188 = scmp.le.s32.totalorder 1, %s11
    %p189 = scmp.lt.s32.totalorder %s11, 3
    %p190 = pnand %p188, %p189
    %p191 = pneg %p190
    // Predicated region
    $region37: #{mlp_forward.1} parent=5 // pred_check
      _
    $region38: #{mlp_forward.1} parent=5 // pred_check_branch
      %193 = sbr.rel (%p190) target = $region40
    $region39: #{mlp_forward.1} parent=5 // pred_region
      %s194 = ssub.s32 %s11, 1
      %s195 = smul.u32 16, %s16
      %p196 = scmp.lt.s32.totalorder %s195, 31
      %s197 = scalar_select %p196, %s195, 31
      %s198 = smul.addr %s197, 7
      %s199 = smul.addr %s198, 4
      %s200 = scalar_lea.vmem %s0, %s199
      %p201 = pneg %p37
      %p202 = pneg %p34
      %p203 = pneg %p58
      %p204 = pneg %p55
      %p205 = pneg %p79
      %p206 = pneg %p76
      %p207 = pneg %p100
      %p208 = pneg %p97
      %p209 = pneg %p121
      %p210 = pneg %p118
      %p211 = pneg %p147
      %p212 = pneg %p144
      %s213 = smul.u32 16, %s16
      %p214 = scmp.lt.s32.totalorder %s213, 31
      %s215 = scalar_select %p214, %s213, 31
      %s216 = smul.addr %s215, 8
      %s217 = scalar_lea.vmem %s5, %s216
      %s218 = smul.u32 16, %s16
      %p219 = scmp.lt.s32.totalorder %s218, 31
      %s220 = scalar_select %p219, %s218, 31
      %s221 = smul.addr %s220, 7
      %s222 = smul.addr %s221, 4
      %s223 = scalar_lea.vmem %s0, %s222
      %s224 = smul.u32 16, %s16
      %s225 = smul.u32 16, %s16
      %p226 = scmp.lt.s32.totalorder %s225, 31
      %s227 = scalar_select %p226, %s225, 31
      %s228 = smul.addr %s227, 8
      %s229 = scalar_lea.vmem %s5, %s228
      %s230 = smul.u32 16, %s16
      %v232 = vld [vmem:[%s223] sm:$0xff]
      %v233 = vld [vmem:[%s223 + $0x8] sm:$0xff]
      %v234 = vld [vmem:[%s223 + $0x10] sm:$0xff]
      %v235 = vld [vmem:[%s223 + $0x18] sm:$0xf]
      %v236 = vld [vmem:[%s223 + $0x1c] sm:$0xff]
      %v237 = vld [vmem:[%s223 + $0x24] sm:$0xff]
      %v238 = vld [vmem:[%s223 + $0x2c] sm:$0xff]
      %v239 = vld [vmem:[%s223 + $0x34] sm:$0xf]
      %v240 = vld [vmem:[%s223 + $0x38] sm:$0xff]
      %v241 = vld [vmem:[%s223 + $0x40] sm:$0xff]
      %v242 = vld [vmem:[%s223 + $0x48] sm:$0xff]
      %v243 = vld [vmem:[%s223 + $0x50] sm:$0xf]
      %v244 = vld [vmem:[%s223 + $0x54] sm:$0xff]
      %v245 = vld [vmem:[%s223 + $0x5c] sm:$0xff]
      %v246 = vld [vmem:[%s223 + $0x64] sm:$0xff]
      %v247 = vld [vmem:[%s223 + $0x6c] sm:$0xf]
      %v248 = vld [vmem:[%s223 + $0x70] sm:$0xff]
      %v249 = vld [vmem:[%s223 + $0x78] sm:$0xff]
      %v250 = vld [vmem:[%s223 + $0x80] sm:$0xff]
      %v251 = vld [vmem:[%s223 + $0x88] sm:$0xf]
      %v252 = vld [vmem:[%s223 + $0x8c] sm:$0xff]
      %v253 = vld [vmem:[%s223 + $0x94] sm:$0xff]
      %v254 = vld [vmem:[%s223 + $0x9c] sm:$0xff]
      %v255 = vld [vmem:[%s223 + $0xa4] sm:$0xf]
      %v256 = vld [vmem:[%s223 + $0xa8] sm:$0xff]
      %v257 = vld [vmem:[%s223 + $0xb0] sm:$0xff]
      %v258 = vld [vmem:[%s223 + $0xb8] sm:$0xff]
      %v259 = vld [vmem:[%s223 + $0xc0] sm:$0xf]
      %v260 = vld [vmem:[%s223 + $0xc4] sm:$0xff]
      %v261 = vld [vmem:[%s223 + $0xcc] sm:$0xff]
      %v262 = vld [vmem:[%s223 + $0xd4] sm:$0xff]
      %v263 = vld [vmem:[%s223 + $0xdc] sm:$0xf]
      %v264 = vld [vmem:[%s223 + $0xe0] sm:$0xff]
      %v265 = vld [vmem:[%s223 + $0xe8] sm:$0xff]
      %v266 = vld [vmem:[%s223 + $0xf0] sm:$0xff]
      %v267 = vld [vmem:[%s223 + $0xf8] sm:$0xf]
      %v268 = vld [vmem:[%s223 + $0xfc] sm:$0xff]
      %v269 = vld [vmem:[%s223 + $0x104] sm:$0xff]
      %v270 = vld [vmem:[%s223 + $0x10c] sm:$0xff]
      %v271 = vld [vmem:[%s223 + $0x114] sm:$0xf]
      %v272 = vld [vmem:[%s223 + $0x118] sm:$0xff]
      %v273 = vld [vmem:[%s223 + $0x120] sm:$0xff]
      %v274 = vld [vmem:[%s223 + $0x128] sm:$0xff]
      %v275 = vld [vmem:[%s223 + $0x130] sm:$0xf]
      %v276 = vld [vmem:[%s223 + $0x134] sm:$0xff]
      %v277 = vld [vmem:[%s223 + $0x13c] sm:$0xff]
      %v278 = vld [vmem:[%s223 + $0x144] sm:$0xff]
      %v279 = vld [vmem:[%s223 + $0x14c] sm:$0xf]
      %v280 = vld [vmem:[%s223 + $0x150] sm:$0xff]
      %v281 = vld [vmem:[%s223 + $0x158] sm:$0xff]
      %v282 = vld [vmem:[%s223 + $0x160] sm:$0xff]
      %v283 = vld [vmem:[%s223 + $0x168] sm:$0xf]
      %v284 = vld [vmem:[%s223 + $0x16c] sm:$0xff]
      %v285 = vld [vmem:[%s223 + $0x174] sm:$0xff]
      %v286 = vld [vmem:[%s223 + $0x17c] sm:$0xff]
      %v287 = vld [vmem:[%s223 + $0x184] sm:$0xf]
      %v288 = vld [vmem:[%s223 + $0x188] sm:$0xff]
      %v289 = vld [vmem:[%s223 + $0x190] sm:$0xff]
      %v290 = vld [vmem:[%s223 + $0x198] sm:$0xff]
      %v291 = vld [vmem:[%s223 + $0x1a0] sm:$0xf]
      %v292 = vld [vmem:[%s223 + $0x1a4] sm:$0xff]
      %v293 = vld [vmem:[%s223 + $0x1ac] sm:$0xff]
      %v294 = vld [vmem:[%s223 + $0x1b4] sm:$0xff]
      %v295 = vld [vmem:[%s223 + $0x1bc] sm:$0xf]
      %v296 = vld [vmem:[%s1] sm:$0xff]
      %v297 = vld [vmem:[%s1 + $0x8] sm:$0xff]
      %v298 = vld [vmem:[%s1 + $0x10] sm:$0xff]
      %v299 = vld [vmem:[%s1 + $0x18] sm:$0xff]
      %v300 = vld [vmem:[%s1 + $0x20] sm:$0xff]
      %v301 = vld [vmem:[%s1 + $0x28] sm:$0xff]
      %v302 = vld [vmem:[%s1 + $0x30] sm:$0xff]
      %v303 = vld [vmem:[%s1 + $0x38] sm:$0xff]
      %v304 = vld [vmem:[%s1 + $0x40] sm:$0xff]
      %v305 = vld [vmem:[%s1 + $0x48] sm:$0xff]
      %v306 = vld [vmem:[%s1 + $0x50] sm:$0xff]
      %v307 = vld [vmem:[%s1 + $0x58] sm:$0xff]
      %v308 = vld [vmem:[%s1 + $0x60] sm:$0xff]
      %v309 = vld [vmem:[%s1 + $0x68] sm:$0xff]
      %v310 = vld [vmem:[%s1 + $0x70] sm:$0xff]
      %v311 = vld [vmem:[%s1 + $0x78] sm:$0xff]
      %v312 = vld [vmem:[%s1 + $0x80] sm:$0xff]
      %v313 = vld [vmem:[%s1 + $0x88] sm:$0xff]
      %v314 = vld [vmem:[%s1 + $0x90] sm:$0xff]
      %v315 = vld [vmem:[%s1 + $0x98] sm:$0xff]
      %v316 = vld [vmem:[%s1 + $0xa0] sm:$0xff]
      %v317 = vld [vmem:[%s1 + $0xa8] sm:$0xff]
      %v318 = vld [vmem:[%s1 + $0xb0] sm:$0xff]
      %v319 = vld [vmem:[%s1 + $0xb8] sm:$0xff]
      %v320 = vld [vmem:[%s1 + $0xc0] sm:$0xff]
      %v321 = vld [vmem:[%s1 + $0xc8] sm:$0xff]
      %v322 = vld [vmem:[%s1 + $0xd0] sm:$0xff]
      %v323 = vld [vmem:[%s1 + $0xd8] sm:$0xff]
      %v324 = vld [vmem:[%s1 + $0xe0] sm:$0xff]
      %v325 = vld [vmem:[%s1 + $0xe8] sm:$0xff]
      %v326 = vld [vmem:[%s1 + $0xf0] sm:$0xff]
      %v327 = vld [vmem:[%s1 + $0xf8] sm:$0xff]
      %v328 = vld [vmem:[%s1 + $0x100] sm:$0xff]
      %v329 = vld [vmem:[%s1 + $0x108] sm:$0xff]
      %v330 = vld [vmem:[%s1 + $0x110] sm:$0xff]
      %v331 = vld [vmem:[%s1 + $0x118] sm:$0xff]
      %v332 = vld [vmem:[%s1 + $0x120] sm:$0xff]
      %v333 = vld [vmem:[%s1 + $0x128] sm:$0xff]
      %v334 = vld [vmem:[%s1 + $0x130] sm:$0xff]
      %v335 = vld [vmem:[%s1 + $0x138] sm:$0xff]
      %v336 = vld [vmem:[%s1 + $0x140] sm:$0xff]
      %v337 = vld [vmem:[%s1 + $0x148] sm:$0xff]
      %v338 = vld [vmem:[%s1 + $0x150] sm:$0xff]
      %v339 = vld [vmem:[%s1 + $0x158] sm:$0xff]
      %v340 = vld [vmem:[%s1 + $0x160] sm:$0xff]
      %v341 = vld [vmem:[%s1 + $0x168] sm:$0xff]
      %v342 = vld [vmem:[%s1 + $0x170] sm:$0xff]
      %v343 = vld [vmem:[%s1 + $0x178] sm:$0xff]
      %v344 = vld [vmem:[%s1 + $0x180] sm:$0xff]
      %v345 = vld [vmem:[%s1 + $0x188] sm:$0xff]
      %v346 = vld [vmem:[%s1 + $0x190] sm:$0xff]
      %v347 = vld [vmem:[%s1 + $0x198] sm:$0xff]
      %v348 = vld [vmem:[%s1 + $0x1a0] sm:$0xff]
      %v349 = vld [vmem:[%s1 + $0x1a8] sm:$0xff]
      %v350 = vld [vmem:[%s1 + $0x1b0] sm:$0xff]
      %v351 = vld [vmem:[%s1 + $0x1b8] sm:$0xff]
      %v352 = vld [vmem:[%s1 + $0x1c0] sm:$0xff]
      %v353 = vld [vmem:[%s1 + $0x1c8] sm:$0xff]
      %v354 = vld [vmem:[%s1 + $0x1d0] sm:$0xff]
      %v355 = vld [vmem:[%s1 + $0x1d8] sm:$0xff]
      %v356 = vld [vmem:[%s1 + $0x1e0] sm:$0xff]
      %v357 = vld [vmem:[%s1 + $0x1e8] sm:$0xff]
      %v358 = vld [vmem:[%s1 + $0x1f0] sm:$0xff]
      %v359 = vld [vmem:[%s1 + $0x1f8] sm:$0xff]
      %v360 = vld [vmem:[%s1 + $0x200] sm:$0xff]
      %v361 = vld [vmem:[%s1 + $0x208] sm:$0xff]
      %v362 = vld [vmem:[%s1 + $0x210] sm:$0xff]
      %v363 = vld [vmem:[%s1 + $0x218] sm:$0xff]
      %v364 = vld [vmem:[%s1 + $0x220] sm:$0xff]
      %v365 = vld [vmem:[%s1 + $0x228] sm:$0xff]
      %v366 = vld [vmem:[%s1 + $0x230] sm:$0xff]
      %v367 = vld [vmem:[%s1 + $0x238] sm:$0xff]
      %v368 = vld [vmem:[%s1 + $0x240] sm:$0xff]
      %v369 = vld [vmem:[%s1 + $0x248] sm:$0xff]
      %v370 = vld [vmem:[%s1 + $0x250] sm:$0xff]
      %v371 = vld [vmem:[%s1 + $0x258] sm:$0xff]
      %v372 = vld [vmem:[%s1 + $0x260] sm:$0xff]
      %v373 = vld [vmem:[%s1 + $0x268] sm:$0xff]
      %v374 = vld [vmem:[%s1 + $0x270] sm:$0xff]
      %v375 = vld [vmem:[%s1 + $0x278] sm:$0xff]
      %v376 = vld [vmem:[%s1 + $0x280] sm:$0xff]
      %v377 = vld [vmem:[%s1 + $0x288] sm:$0xff]
      %v378 = vld [vmem:[%s1 + $0x290] sm:$0xff]
      %v379 = vld [vmem:[%s1 + $0x298] sm:$0xff]
      %v380 = vld [vmem:[%s1 + $0x2a0] sm:$0xff]
      %v381 = vld [vmem:[%s1 + $0x2a8] sm:$0xff]
      %v382 = vld [vmem:[%s1 + $0x2b0] sm:$0xff]
      %v383 = vld [vmem:[%s1 + $0x2b8] sm:$0xff]
      %v384 = vld [vmem:[%s1 + $0x2c0] sm:$0xff]
      %v385 = vld [vmem:[%s1 + $0x2c8] sm:$0xff]
      %v386 = vld [vmem:[%s1 + $0x2d0] sm:$0xff]
      %v387 = vld [vmem:[%s1 + $0x2d8] sm:$0xff]
      %v388 = vld [vmem:[%s1 + $0x2e0] sm:$0xff]
      %v389 = vld [vmem:[%s1 + $0x2e8] sm:$0xff]
      %v390 = vld [vmem:[%s1 + $0x2f0] sm:$0xff]
      %v391 = vld [vmem:[%s1 + $0x2f8] sm:$0xff]
      %v392 = vld [vmem:[%s1 + $0x300] sm:$0xff]
      %v393 = vld [vmem:[%s1 + $0x308] sm:$0xff]
      %v394 = vld [vmem:[%s1 + $0x310] sm:$0xff]
      %v395 = vld [vmem:[%s1 + $0x318] sm:$0xff]
      %v396 = vld [vmem:[%s1 + $0x320] sm:$0xff]
      %v397 = vld [vmem:[%s1 + $0x328] sm:$0xff]
      %v398 = vld [vmem:[%s1 + $0x330] sm:$0xff]
      %v399 = vld [vmem:[%s1 + $0x338] sm:$0xff]
      %v400 = vld [vmem:[%s1 + $0x340] sm:$0xff]
      %v401 = vld [vmem:[%s1 + $0x348] sm:$0xff]
      %v402 = vld [vmem:[%s1 + $0x350] sm:$0xff]
      %v403 = vld [vmem:[%s1 + $0x358] sm:$0xff]
      %v404 = vld [vmem:[%s1 + $0x360] sm:$0xff]
      %v405 = vld [vmem:[%s1 + $0x368] sm:$0xff]
      %v406 = vld [vmem:[%s1 + $0x370] sm:$0xff]
      %v407 = vld [vmem:[%s1 + $0x378] sm:$0xff]
      %v408 = vld [vmem:[%s1 + $0x380] sm:$0xff]
      %v409 = vld [vmem:[%s1 + $0x388] sm:$0xff]
      %v410 = vld [vmem:[%s1 + $0x390] sm:$0xff]
      %v411 = vld [vmem:[%s1 + $0x398] sm:$0xff]
      %v412 = vld [vmem:[%s1 + $0x3a0] sm:$0xff]
      %v413 = vld [vmem:[%s1 + $0x3a8] sm:$0xff]
      %v414 = vld [vmem:[%s1 + $0x3b0] sm:$0xff]
      %v415 = vld [vmem:[%s1 + $0x3b8] sm:$0xff]
      %v416 = vld [vmem:[%s1 + $0x3c0] sm:$0xff]
      %v417 = vld [vmem:[%s1 + $0x3c8] sm:$0xff]
      %v418 = vld [vmem:[%s1 + $0x3d0] sm:$0xff]
      %v419 = vld [vmem:[%s1 + $0x3d8] sm:$0xff]
      %v420 = vld [vmem:[%s1 + $0x3e0] sm:$0xff]
      %v421 = vld [vmem:[%s1 + $0x3e8] sm:$0xff]
      %v422 = vld [vmem:[%s1 + $0x3f0] sm:$0xff]
      %v423 = vld [vmem:[%s1 + $0x3f8] sm:$0xff]
      %v424 = vld [vmem:[%s1 + $0x400] sm:$0xff]
      %v425 = vld [vmem:[%s1 + $0x408] sm:$0xff]
      %v426 = vld [vmem:[%s1 + $0x410] sm:$0xff]
      %v427 = vld [vmem:[%s1 + $0x418] sm:$0xff]
      %v428 = vld [vmem:[%s1 + $0x420] sm:$0xff]
      %v429 = vld [vmem:[%s1 + $0x428] sm:$0xff]
      %v430 = vld [vmem:[%s1 + $0x430] sm:$0xff]
      %v431 = vld [vmem:[%s1 + $0x438] sm:$0xff]
      %v432 = vld [vmem:[%s1 + $0x440] sm:$0xff]
      %v433 = vld [vmem:[%s1 + $0x448] sm:$0xff]
      %v434 = vld [vmem:[%s1 + $0x450] sm:$0xff]
      %v435 = vld [vmem:[%s1 + $0x458] sm:$0xff]
      %v436 = vld [vmem:[%s1 + $0x460] sm:$0xff]
      %v437 = vld [vmem:[%s1 + $0x468] sm:$0xff]
      %v438 = vld [vmem:[%s1 + $0x470] sm:$0xff]
      %v439 = vld [vmem:[%s1 + $0x478] sm:$0xff]
      %v440 = vld [vmem:[%s1 + $0x480] sm:$0xff]
      %v441 = vld [vmem:[%s1 + $0x488] sm:$0xff]
      %v442 = vld [vmem:[%s1 + $0x490] sm:$0xff]
      %v443 = vld [vmem:[%s1 + $0x498] sm:$0xff]
      %v444 = vld [vmem:[%s1 + $0x4a0] sm:$0xff]
      %v445 = vld [vmem:[%s1 + $0x4a8] sm:$0xff]
      %v446 = vld [vmem:[%s1 + $0x4b0] sm:$0xff]
      %v447 = vld [vmem:[%s1 + $0x4b8] sm:$0xff]
      %v448 = vld [vmem:[%s1 + $0x4c0] sm:$0xff]
      %v449 = vld [vmem:[%s1 + $0x4c8] sm:$0xff]
      %v450 = vld [vmem:[%s1 + $0x4d0] sm:$0xff]
      %v451 = vld [vmem:[%s1 + $0x4d8] sm:$0xff]
      %v452 = vld [vmem:[%s1 + $0x4e0] sm:$0xff]
      %v453 = vld [vmem:[%s1 + $0x4e8] sm:$0xff]
      %v454 = vld [vmem:[%s1 + $0x4f0] sm:$0xff]
      %v455 = vld [vmem:[%s1 + $0x4f8] sm:$0xff]
      %v456 = vld [vmem:[%s1 + $0x500] sm:$0xff]
      %v457 = vld [vmem:[%s1 + $0x508] sm:$0xff]
      %v458 = vld [vmem:[%s1 + $0x510] sm:$0xff]
      %v459 = vld [vmem:[%s1 + $0x518] sm:$0xff]
      %v460 = vld [vmem:[%s1 + $0x520] sm:$0xff]
      %v461 = vld [vmem:[%s1 + $0x528] sm:$0xff]
      %v462 = vld [vmem:[%s1 + $0x530] sm:$0xff]
      %v463 = vld [vmem:[%s1 + $0x538] sm:$0xff]
      %v464 = vld [vmem:[%s1 + $0x540] sm:$0xff]
      %v465 = vld [vmem:[%s1 + $0x548] sm:$0xff]
      %v466 = vld [vmem:[%s1 + $0x550] sm:$0xff]
      %v467 = vld [vmem:[%s1 + $0x558] sm:$0xff]
      %v468 = vld [vmem:[%s1 + $0x560] sm:$0xff]
      %v469 = vld [vmem:[%s1 + $0x568] sm:$0xff]
      %v470 = vld [vmem:[%s1 + $0x570] sm:$0xff]
      %v471 = vld [vmem:[%s1 + $0x578] sm:$0xff]
      %v472 = vld [vmem:[%s1 + $0x580] sm:$0xff]
      %v473 = vld [vmem:[%s1 + $0x588] sm:$0xff]
      %v474 = vld [vmem:[%s1 + $0x590] sm:$0xff]
      %v475 = vld [vmem:[%s1 + $0x598] sm:$0xff]
      %v476 = vld [vmem:[%s1 + $0x5a0] sm:$0xff]
      %v477 = vld [vmem:[%s1 + $0x5a8] sm:$0xff]
      %v478 = vld [vmem:[%s1 + $0x5b0] sm:$0xff]
      %v479 = vld [vmem:[%s1 + $0x5b8] sm:$0xff]
      %v480 = vld [vmem:[%s1 + $0x5c0] sm:$0xff]
      %v481 = vld [vmem:[%s1 + $0x5c8] sm:$0xff]
      %v482 = vld [vmem:[%s1 + $0x5d0] sm:$0xff]
      %v483 = vld [vmem:[%s1 + $0x5d8] sm:$0xff]
      %v484 = vld [vmem:[%s1 + $0x5e0] sm:$0xff]
      %v485 = vld [vmem:[%s1 + $0x5e8] sm:$0xff]
      %v486 = vld [vmem:[%s1 + $0x5f0] sm:$0xff]
      %v487 = vld [vmem:[%s1 + $0x5f8] sm:$0xff]
      %v488 = vld [vmem:[%s1 + $0x600] sm:$0xff]
      %v489 = vld [vmem:[%s1 + $0x608] sm:$0xff]
      %v490 = vld [vmem:[%s1 + $0x610] sm:$0xff]
      %v491 = vld [vmem:[%s1 + $0x618] sm:$0xff]
      %v492 = vld [vmem:[%s2] sm:$0xf]
      %v494 = vlaneseq
      %v495 = vshrl.u32 %v494, 7
      %v496 = vsub.s32 0, %v495
      %v497 = vrot.slane %v492, %v496
      %v498 = vlaneseq
      %v499 = vshrl.u32 %v498, 7
      %v500 = vsub.s32 1, %v499
      %v501 = vrot.slane %v492, %v500
      %v502 = vlaneseq
      %v503 = vshrl.u32 %v502, 7
      %v504 = vsub.s32 2, %v503
      %v505 = vrot.slane %v492, %v504
      %v506 = vlaneseq
      %v507 = vshrl.u32 %v506, 7
      %v508 = vsub.s32 3, %v507
      %v509 = vrot.slane %v492, %v508
      %v578 = vunpack.c.l.b16 %v232
      %v579 = vunpack.c.h.b16 %v232
      %v580 = vunpack.c.l.b16 %v233
      %v581 = vunpack.c.h.b16 %v233
      %v582 = vunpack.c.l.b16 %v234
      %v583 = vunpack.c.h.b16 %v234
      %v584 = vunpack.c.l.b16 %v235
      %v585 = vunpack.c.l.b16 %v236
      %v586 = vunpack.c.h.b16 %v236
      %v587 = vunpack.c.l.b16 %v237
      %v588 = vunpack.c.h.b16 %v237
      %v589 = vunpack.c.l.b16 %v238
      %v590 = vunpack.c.h.b16 %v238
      %v591 = vunpack.c.l.b16 %v239
      %v592 = vunpack.c.l.b16 %v240
      %v593 = vunpack.c.h.b16 %v240
      %v594 = vunpack.c.l.b16 %v241
      %v595 = vunpack.c.h.b16 %v241
      %v596 = vunpack.c.l.b16 %v242
      %v597 = vunpack.c.h.b16 %v242
      %v598 = vunpack.c.l.b16 %v243
      %v599 = vunpack.c.l.b16 %v244
      %v600 = vunpack.c.h.b16 %v244
      %v601 = vunpack.c.l.b16 %v245
      %v602 = vunpack.c.h.b16 %v245
      %v603 = vunpack.c.l.b16 %v246
      %v604 = vunpack.c.h.b16 %v246
      %v605 = vunpack.c.l.b16 %v247
      %v606 = vunpack.c.l.b16 %v248
      %v607 = vunpack.c.h.b16 %v248
      %v608 = vunpack.c.l.b16 %v249
      %v609 = vunpack.c.h.b16 %v249
      %v610 = vunpack.c.l.b16 %v250
      %v611 = vunpack.c.h.b16 %v250
      %v612 = vunpack.c.l.b16 %v251
      %v613 = vunpack.c.l.b16 %v252
      %v614 = vunpack.c.h.b16 %v252
      %v615 = vunpack.c.l.b16 %v253
      %v616 = vunpack.c.h.b16 %v253
      %v617 = vunpack.c.l.b16 %v254
      %v618 = vunpack.c.h.b16 %v254
      %v619 = vunpack.c.l.b16 %v255
      %v620 = vunpack.c.l.b16 %v256
      %v621 = vunpack.c.h.b16 %v256
      %v622 = vunpack.c.l.b16 %v257
      %v623 = vunpack.c.h.b16 %v257
      %v624 = vunpack.c.l.b16 %v258
      %v625 = vunpack.c.h.b16 %v258
      %v626 = vunpack.c.l.b16 %v259
      %v627 = vunpack.c.l.b16 %v260
      %v628 = vunpack.c.h.b16 %v260
      %v629 = vunpack.c.l.b16 %v261
      %v630 = vunpack.c.h.b16 %v261
      %v631 = vunpack.c.l.b16 %v262
      %v632 = vunpack.c.h.b16 %v262
      %v633 = vunpack.c.l.b16 %v263
      %v634 = vunpack.c.l.b16 %v264
      %v635 = vunpack.c.h.b16 %v264
      %v636 = vunpack.c.l.b16 %v265
      %v637 = vunpack.c.h.b16 %v265
      %v638 = vunpack.c.l.b16 %v266
      %v639 = vunpack.c.h.b16 %v266
      %v640 = vunpack.c.l.b16 %v267
      %v641 = vunpack.c.l.b16 %v268
      %v642 = vunpack.c.h.b16 %v268
      %v643 = vunpack.c.l.b16 %v269
      %v644 = vunpack.c.h.b16 %v269
      %v645 = vunpack.c.l.b16 %v270
      %v646 = vunpack.c.h.b16 %v270
      %v647 = vunpack.c.l.b16 %v271
      %v648 = vunpack.c.l.b16 %v272
      %v649 = vunpack.c.h.b16 %v272
      %v650 = vunpack.c.l.b16 %v273
      %v651 = vunpack.c.h.b16 %v273
      %v652 = vunpack.c.l.b16 %v274
      %v653 = vunpack.c.h.b16 %v274
      %v654 = vunpack.c.l.b16 %v275
      %v655 = vunpack.c.l.b16 %v276
      %v656 = vunpack.c.h.b16 %v276
      %v657 = vunpack.c.l.b16 %v277
      %v658 = vunpack.c.h.b16 %v277
      %v659 = vunpack.c.l.b16 %v278
      %v660 = vunpack.c.h.b16 %v278
      %v661 = vunpack.c.l.b16 %v279
      %v662 = vunpack.c.l.b16 %v280
      %v663 = vunpack.c.h.b16 %v280
      %v664 = vunpack.c.l.b16 %v281
      %v665 = vunpack.c.h.b16 %v281
      %v666 = vunpack.c.l.b16 %v282
      %v667 = vunpack.c.h.b16 %v282
      %v668 = vunpack.c.l.b16 %v283
      %v669 = vunpack.c.l.b16 %v284
      %v670 = vunpack.c.h.b16 %v284
      %v671 = vunpack.c.l.b16 %v285
      %v672 = vunpack.c.h.b16 %v285
      %v673 = vunpack.c.l.b16 %v286
      %v674 = vunpack.c.h.b16 %v286
      %v675 = vunpack.c.l.b16 %v287
      %v676 = vunpack.c.l.b16 %v288
      %v677 = vunpack.c.h.b16 %v288
      %v678 = vunpack.c.l.b16 %v289
      %v679 = vunpack.c.h.b16 %v289
      %v680 = vunpack.c.l.b16 %v290
      %v681 = vunpack.c.h.b16 %v290
      %v682 = vunpack.c.l.b16 %v291
      %v683 = vunpack.c.l.b16 %v292
      %v684 = vunpack.c.h.b16 %v292
      %v685 = vunpack.c.l.b16 %v293
      %v686 = vunpack.c.h.b16 %v293
      %v687 = vunpack.c.l.b16 %v294
      %v688 = vunpack.c.h.b16 %v294
      %v689 = vunpack.c.l.b16 %v295
      %v690 = vpack.c.b16 %v585, %v578
      %v691 = vpack.c.b16 %v586, %v579
      %v692 = vpack.c.b16 %v587, %v580
      %v693 = vpack.c.b16 %v588, %v581
      %v694 = vpack.c.b16 %v589, %v582
      %v695 = vpack.c.b16 %v590, %v583
      %v696 = vpack.c.b16 %v591, %v584
      %v697 = vpack.c.b16 %v599, %v592
      %v698 = vpack.c.b16 %v600, %v593
      %v699 = vpack.c.b16 %v601, %v594
      %v700 = vpack.c.b16 %v602, %v595
      %v701 = vpack.c.b16 %v603, %v596
      %v702 = vpack.c.b16 %v604, %v597
      %v703 = vpack.c.b16 %v605, %v598
      %v704 = vpack.c.b16 %v613, %v606
      %v705 = vpack.c.b16 %v614, %v607
      %v706 = vpack.c.b16 %v615, %v608
      %v707 = vpack.c.b16 %v616, %v609
      %v708 = vpack.c.b16 %v617, %v610
      %v709 = vpack.c.b16 %v618, %v611
      %v710 = vpack.c.b16 %v619, %v612
      %v711 = vpack.c.b16 %v627, %v620
      %v712 = vpack.c.b16 %v628, %v621
      %v713 = vpack.c.b16 %v629, %v622
      %v714 = vpack.c.b16 %v630, %v623
      %v715 = vpack.c.b16 %v631, %v624
      %v716 = vpack.c.b16 %v632, %v625
      %v717 = vpack.c.b16 %v633, %v626
      %v718 = vpack.c.b16 %v641, %v634
      %v719 = vpack.c.b16 %v642, %v635
      %v720 = vpack.c.b16 %v643, %v636
      %v721 = vpack.c.b16 %v644, %v637
      %v722 = vpack.c.b16 %v645, %v638
      %v723 = vpack.c.b16 %v646, %v639
      %v724 = vpack.c.b16 %v647, %v640
      %v725 = vpack.c.b16 %v655, %v648
      %v726 = vpack.c.b16 %v656, %v649
      %v727 = vpack.c.b16 %v657, %v650
      %v728 = vpack.c.b16 %v658, %v651
      %v729 = vpack.c.b16 %v659, %v652
      %v730 = vpack.c.b16 %v660, %v653
      %v731 = vpack.c.b16 %v661, %v654
      %v732 = vpack.c.b16 %v669, %v662
      %v733 = vpack.c.b16 %v670, %v663
      %v734 = vpack.c.b16 %v671, %v664
      %v735 = vpack.c.b16 %v672, %v665
      %v736 = vpack.c.b16 %v673, %v666
      %v737 = vpack.c.b16 %v674, %v667
      %v738 = vpack.c.b16 %v675, %v668
      %v739 = vpack.c.b16 %v683, %v676
      %v740 = vpack.c.b16 %v684, %v677
      %v741 = vpack.c.b16 %v685, %v678
      %v742 = vpack.c.b16 %v686, %v679
      %v743 = vpack.c.b16 %v687, %v680
      %v744 = vpack.c.b16 %v688, %v681
      %v745 = vpack.c.b16 %v689, %v682
      %v990 = vunpack.c.l.b16 %v296
      %v991 = vunpack.c.h.b16 %v296
      %v992 = vunpack.c.l.b16 %v297
      %v993 = vunpack.c.h.b16 %v297
      %v994 = vunpack.c.l.b16 %v298
      %v995 = vunpack.c.h.b16 %v298
      %v996 = vunpack.c.l.b16 %v299
      %v997 = vunpack.c.h.b16 %v299
      %v998 = vunpack.c.l.b16 %v300
      %v999 = vunpack.c.h.b16 %v300
      %v1000 = vunpack.c.l.b16 %v301
      %v1001 = vunpack.c.h.b16 %v301
      %v1002 = vunpack.c.l.b16 %v302
      %v1003 = vunpack.c.h.b16 %v302
      %v1004 = vunpack.c.l.b16 %v303
      %v1005 = vunpack.c.h.b16 %v303
      %v1006 = vunpack.c.l.b16 %v304
      %v1007 = vunpack.c.h.b16 %v304
      %v1008 = vunpack.c.l.b16 %v305
      %v1009 = vunpack.c.h.b16 %v305
      %v1010 = vunpack.c.l.b16 %v306
      %v1011 = vunpack.c.h.b16 %v306
      %v1012 = vunpack.c.l.b16 %v307
      %v1013 = vunpack.c.h.b16 %v307
      %v1014 = vunpack.c.l.b16 %v308
      %v1015 = vunpack.c.h.b16 %v308
      %v1016 = vunpack.c.l.b16 %v309
      %v1017 = vunpack.c.h.b16 %v309
      %v1018 = vunpack.c.l.b16 %v310
      %v1019 = vunpack.c.h.b16 %v310
      %v1020 = vunpack.c.l.b16 %v311
      %v1021 = vunpack.c.h.b16 %v311
      %v1022 = vunpack.c.l.b16 %v312
      %v1023 = vunpack.c.h.b16 %v312
      %v1024 = vunpack.c.l.b16 %v313
      %v1025 = vunpack.c.h.b16 %v313
      %v1026 = vunpack.c.l.b16 %v314
      %v1027 = vunpack.c.h.b16 %v314
      %v1028 = vunpack.c.l.b16 %v315
      %v1029 = vunpack.c.h.b16 %v315
      %v1030 = vunpack.c.l.b16 %v316
      %v1031 = vunpack.c.h.b16 %v316
      %v1032 = vunpack.c.l.b16 %v317
      %v1033 = vunpack.c.h.b16 %v317
      %v1034 = vunpack.c.l.b16 %v318
      %v1035 = vunpack.c.h.b16 %v318
      %v1036 = vunpack.c.l.b16 %v319
      %v1037 = vunpack.c.h.b16 %v319
      %v1038 = vunpack.c.l.b16 %v320
      %v1039 = vunpack.c.h.b16 %v320
      %v1040 = vunpack.c.l.b16 %v321
      %v1041 = vunpack.c.h.b16 %v321
      %v1042 = vunpack.c.l.b16 %v322
      %v1043 = vunpack.c.h.b16 %v322
      %v1044 = vunpack.c.l.b16 %v323
      %v1045 = vunpack.c.h.b16 %v323
      %v1046 = vunpack.c.l.b16 %v324
      %v1047 = vunpack.c.h.b16 %v324
      %v1048 = vunpack.c.l.b16 %v325
      %v1049 = vunpack.c.h.b16 %v325
      %v1050 = vunpack.c.l.b16 %v326
      %v1051 = vunpack.c.h.b16 %v326
      %v1052 = vunpack.c.l.b16 %v327
      %v1053 = vunpack.c.h.b16 %v327
      %v1054 = vunpack.c.l.b16 %v328
      %v1055 = vunpack.c.h.b16 %v328
      %v1056 = vunpack.c.l.b16 %v329
      %v1057 = vunpack.c.h.b16 %v329
      %v1058 = vunpack.c.l.b16 %v330
      %v1059 = vunpack.c.h.b16 %v330
      %v1060 = vunpack.c.l.b16 %v331
      %v1061 = vunpack.c.h.b16 %v331
      %v1062 = vunpack.c.l.b16 %v332
      %v1063 = vunpack.c.h.b16 %v332
      %v1064 = vunpack.c.l.b16 %v333
      %v1065 = vunpack.c.h.b16 %v333
      %v1066 = vunpack.c.l.b16 %v334
      %v1067 = vunpack.c.h.b16 %v334
      %v1068 = vunpack.c.l.b16 %v335
      %v1069 = vunpack.c.h.b16 %v335
      %v1070 = vunpack.c.l.b16 %v336
      %v1071 = vunpack.c.h.b16 %v336
      %v1072 = vunpack.c.l.b16 %v337
      %v1073 = vunpack.c.h.b16 %v337
      %v1074 = vunpack.c.l.b16 %v338
      %v1075 = vunpack.c.h.b16 %v338
      %v1076 = vunpack.c.l.b16 %v339
      %v1077 = vunpack.c.h.b16 %v339
      %v1078 = vunpack.c.l.b16 %v340
      %v1079 = vunpack.c.h.b16 %v340
      %v1080 = vunpack.c.l.b16 %v341
      %v1081 = vunpack.c.h.b16 %v341
      %v1082 = vunpack.c.l.b16 %v342
      %v1083 = vunpack.c.h.b16 %v342
      %v1084 = vunpack.c.l.b16 %v343
      %v1085 = vunpack.c.h.b16 %v343
      %v1086 = vunpack.c.l.b16 %v344
      %v1087 = vunpack.c.h.b16 %v344
      %v1088 = vunpack.c.l.b16 %v345
      %v1089 = vunpack.c.h.b16 %v345
      %v1090 = vunpack.c.l.b16 %v346
      %v1091 = vunpack.c.h.b16 %v346
      %v1092 = vunpack.c.l.b16 %v347
      %v1093 = vunpack.c.h.b16 %v347
      %v1094 = vunpack.c.l.b16 %v348
      %v1095 = vunpack.c.h.b16 %v348
      %v1096 = vunpack.c.l.b16 %v349
      %v1097 = vunpack.c.h.b16 %v349
      %v1098 = vunpack.c.l.b16 %v350
      %v1099 = vunpack.c.h.b16 %v350
      %v1100 = vunpack.c.l.b16 %v351
      %v1101 = vunpack.c.h.b16 %v351
      %v1102 = vunpack.c.l.b16 %v352
      %v1103 = vunpack.c.h.b16 %v352
      %v1104 = vunpack.c.l.b16 %v353
      %v1105 = vunpack.c.h.b16 %v353
      %v1106 = vunpack.c.l.b16 %v354
      %v1107 = vunpack.c.h.b16 %v354
      %v1108 = vunpack.c.l.b16 %v355
      %v1109 = vunpack.c.h.b16 %v355
      %v1110 = vunpack.c.l.b16 %v356
      %v1111 = vunpack.c.h.b16 %v356
      %v1112 = vunpack.c.l.b16 %v357
      %v1113 = vunpack.c.h.b16 %v357
      %v1114 = vunpack.c.l.b16 %v358
      %v1115 = vunpack.c.h.b16 %v358
      %v1116 = vunpack.c.l.b16 %v359
      %v1117 = vunpack.c.h.b16 %v359
      %v1118 = vunpack.c.l.b16 %v360
      %v1119 = vunpack.c.h.b16 %v360
      %v1120 = vunpack.c.l.b16 %v361
      %v1121 = vunpack.c.h.b16 %v361
      %v1122 = vunpack.c.l.b16 %v362
      %v1123 = vunpack.c.h.b16 %v362
      %v1124 = vunpack.c.l.b16 %v363
      %v1125 = vunpack.c.h.b16 %v363
      %v1126 = vunpack.c.l.b16 %v364
      %v1127 = vunpack.c.h.b16 %v364
      %v1128 = vunpack.c.l.b16 %v365
      %v1129 = vunpack.c.h.b16 %v365
      %v1130 = vunpack.c.l.b16 %v366
      %v1131 = vunpack.c.h.b16 %v366
      %v1132 = vunpack.c.l.b16 %v367
      %v1133 = vunpack.c.h.b16 %v367
      %v1134 = vunpack.c.l.b16 %v368
      %v1135 = vunpack.c.h.b16 %v368
      %v1136 = vunpack.c.l.b16 %v369
      %v1137 = vunpack.c.h.b16 %v369
      %v1138 = vunpack.c.l.b16 %v370
      %v1139 = vunpack.c.h.b16 %v370
      %v1140 = vunpack.c.l.b16 %v371
      %v1141 = vunpack.c.h.b16 %v371
      %v1142 = vunpack.c.l.b16 %v372
      %v1143 = vunpack.c.h.b16 %v372
      %v1144 = vunpack.c.l.b16 %v373
      %v1145 = vunpack.c.h.b16 %v373
      %v1146 = vunpack.c.l.b16 %v374
      %v1147 = vunpack.c.h.b16 %v374
      %v1148 = vunpack.c.l.b16 %v375
      %v1149 = vunpack.c.h.b16 %v375
      %v1150 = vunpack.c.l.b16 %v376
      %v1151 = vunpack.c.h.b16 %v376
      %v1152 = vunpack.c.l.b16 %v377
      %v1153 = vunpack.c.h.b16 %v377
      %v1154 = vunpack.c.l.b16 %v378
      %v1155 = vunpack.c.h.b16 %v378
      %v1156 = vunpack.c.l.b16 %v379
      %v1157 = vunpack.c.h.b16 %v379
      %v1158 = vunpack.c.l.b16 %v380
      %v1159 = vunpack.c.h.b16 %v380
      %v1160 = vunpack.c.l.b16 %v381
      %v1161 = vunpack.c.h.b16 %v381
      %v1162 = vunpack.c.l.b16 %v382
      %v1163 = vunpack.c.h.b16 %v382
      %v1164 = vunpack.c.l.b16 %v383
      %v1165 = vunpack.c.h.b16 %v383
      %v1166 = vunpack.c.l.b16 %v384
      %v1167 = vunpack.c.h.b16 %v384
      %v1168 = vunpack.c.l.b16 %v385
      %v1169 = vunpack.c.h.b16 %v385
      %v1170 = vunpack.c.l.b16 %v386
      %v1171 = vunpack.c.h.b16 %v386
      %v1172 = vunpack.c.l.b16 %v387
      %v1173 = vunpack.c.h.b16 %v387
      %v1174 = vunpack.c.l.b16 %v388
      %v1175 = vunpack.c.h.b16 %v388
      %v1176 = vunpack.c.l.b16 %v389
      %v1177 = vunpack.c.h.b16 %v389
      %v1178 = vunpack.c.l.b16 %v390
      %v1179 = vunpack.c.h.b16 %v390
      %v1180 = vunpack.c.l.b16 %v391
      %v1181 = vunpack.c.h.b16 %v391
      %v1182 = vunpack.c.l.b16 %v392
      %v1183 = vunpack.c.h.b16 %v392
      %v1184 = vunpack.c.l.b16 %v393
      %v1185 = vunpack.c.h.b16 %v393
      %v1186 = vunpack.c.l.b16 %v394
      %v1187 = vunpack.c.h.b16 %v394
      %v1188 = vunpack.c.l.b16 %v395
      %v1189 = vunpack.c.h.b16 %v395
      %v1190 = vunpack.c.l.b16 %v396
      %v1191 = vunpack.c.h.b16 %v396
      %v1192 = vunpack.c.l.b16 %v397
      %v1193 = vunpack.c.h.b16 %v397
      %v1194 = vunpack.c.l.b16 %v398
      %v1195 = vunpack.c.h.b16 %v398
      %v1196 = vunpack.c.l.b16 %v399
      %v1197 = vunpack.c.h.b16 %v399
      %v1198 = vunpack.c.l.b16 %v400
      %v1199 = vunpack.c.h.b16 %v400
      %v1200 = vunpack.c.l.b16 %v401
      %v1201 = vunpack.c.h.b16 %v401
      %v1202 = vunpack.c.l.b16 %v402
      %v1203 = vunpack.c.h.b16 %v402
      %v1204 = vunpack.c.l.b16 %v403
      %v1205 = vunpack.c.h.b16 %v403
      %v1206 = vunpack.c.l.b16 %v404
      %v1207 = vunpack.c.h.b16 %v404
      %v1208 = vunpack.c.l.b16 %v405
      %v1209 = vunpack.c.h.b16 %v405
      %v1210 = vunpack.c.l.b16 %v406
      %v1211 = vunpack.c.h.b16 %v406
      %v1212 = vunpack.c.l.b16 %v407
      %v1213 = vunpack.c.h.b16 %v407
      %v1214 = vunpack.c.l.b16 %v408
      %v1215 = vunpack.c.h.b16 %v408
      %v1216 = vunpack.c.l.b16 %v409
      %v1217 = vunpack.c.h.b16 %v409
      %v1218 = vunpack.c.l.b16 %v410
      %v1219 = vunpack.c.h.b16 %v410
      %v1220 = vunpack.c.l.b16 %v411
      %v1221 = vunpack.c.h.b16 %v411
      %v1222 = vunpack.c.l.b16 %v412
      %v1223 = vunpack.c.h.b16 %v412
      %v1224 = vunpack.c.l.b16 %v413
      %v1225 = vunpack.c.h.b16 %v413
      %v1226 = vunpack.c.l.b16 %v414
      %v1227 = vunpack.c.h.b16 %v414
      %v1228 = vunpack.c.l.b16 %v415
      %v1229 = vunpack.c.h.b16 %v415
      %v1230 = vunpack.c.l.b16 %v416
      %v1231 = vunpack.c.h.b16 %v416
      %v1232 = vunpack.c.l.b16 %v417
      %v1233 = vunpack.c.h.b16 %v417
      %v1234 = vunpack.c.l.b16 %v418
      %v1235 = vunpack.c.h.b16 %v418
      %v1236 = vunpack.c.l.b16 %v419
      %v1237 = vunpack.c.h.b16 %v419
      %v1238 = vunpack.c.l.b16 %v420
      %v1239 = vunpack.c.h.b16 %v420
      %v1240 = vunpack.c.l.b16 %v421
      %v1241 = vunpack.c.h.b16 %v421
      %v1242 = vunpack.c.l.b16 %v422
      %v1243 = vunpack.c.h.b16 %v422
      %v1244 = vunpack.c.l.b16 %v423
      %v1245 = vunpack.c.h.b16 %v423
      %v1246 = vunpack.c.l.b16 %v424
      %v1247 = vunpack.c.h.b16 %v424
      %v1248 = vunpack.c.l.b16 %v425
      %v1249 = vunpack.c.h.b16 %v425
      %v1250 = vunpack.c.l.b16 %v426
      %v1251 = vunpack.c.h.b16 %v426
      %v1252 = vunpack.c.l.b16 %v427
      %v1253 = vunpack.c.h.b16 %v427
      %v1254 = vunpack.c.l.b16 %v428
      %v1255 = vunpack.c.h.b16 %v428
      %v1256 = vunpack.c.l.b16 %v429
      %v1257 = vunpack.c.h.b16 %v429
      %v1258 = vunpack.c.l.b16 %v430
      %v1259 = vunpack.c.h.b16 %v430
      %v1260 = vunpack.c.l.b16 %v431
      %v1261 = vunpack.c.h.b16 %v431
      %v1262 = vunpack.c.l.b16 %v432
      %v1263 = vunpack.c.h.b16 %v432
      %v1264 = vunpack.c.l.b16 %v433
      %v1265 = vunpack.c.h.b16 %v433
      %v1266 = vunpack.c.l.b16 %v434
      %v1267 = vunpack.c.h.b16 %v434
      %v1268 = vunpack.c.l.b16 %v435
      %v1269 = vunpack.c.h.b16 %v435
      %v1270 = vunpack.c.l.b16 %v436
      %v1271 = vunpack.c.h.b16 %v436
      %v1272 = vunpack.c.l.b16 %v437
      %v1273 = vunpack.c.h.b16 %v437
      %v1274 = vunpack.c.l.b16 %v438
      %v1275 = vunpack.c.h.b16 %v438
      %v1276 = vunpack.c.l.b16 %v439
      %v1277 = vunpack.c.h.b16 %v439
      %v1278 = vunpack.c.l.b16 %v440
      %v1279 = vunpack.c.h.b16 %v440
      %v1280 = vunpack.c.l.b16 %v441
      %v1281 = vunpack.c.h.b16 %v441
      %v1282 = vunpack.c.l.b16 %v442
      %v1283 = vunpack.c.h.b16 %v442
      %v1284 = vunpack.c.l.b16 %v443
      %v1285 = vunpack.c.h.b16 %v443
      %v1286 = vunpack.c.l.b16 %v444
      %v1287 = vunpack.c.h.b16 %v444
      %v1288 = vunpack.c.l.b16 %v445
      %v1289 = vunpack.c.h.b16 %v445
      %v1290 = vunpack.c.l.b16 %v446
      %v1291 = vunpack.c.h.b16 %v446
      %v1292 = vunpack.c.l.b16 %v447
      %v1293 = vunpack.c.h.b16 %v447
      %v1294 = vunpack.c.l.b16 %v448
      %v1295 = vunpack.c.h.b16 %v448
      %v1296 = vunpack.c.l.b16 %v449
      %v1297 = vunpack.c.h.b16 %v449
      %v1298 = vunpack.c.l.b16 %v450
      %v1299 = vunpack.c.h.b16 %v450
      %v1300 = vunpack.c.l.b16 %v451
      %v1301 = vunpack.c.h.b16 %v451
      %v1302 = vunpack.c.l.b16 %v452
      %v1303 = vunpack.c.h.b16 %v452
      %v1304 = vunpack.c.l.b16 %v453
      %v1305 = vunpack.c.h.b16 %v453
      %v1306 = vunpack.c.l.b16 %v454
      %v1307 = vunpack.c.h.b16 %v454
      %v1308 = vunpack.c.l.b16 %v455
      %v1309 = vunpack.c.h.b16 %v455
      %v1310 = vunpack.c.l.b16 %v456
      %v1311 = vunpack.c.h.b16 %v456
      %v1312 = vunpack.c.l.b16 %v457
      %v1313 = vunpack.c.h.b16 %v457
      %v1314 = vunpack.c.l.b16 %v458
      %v1315 = vunpack.c.h.b16 %v458
      %v1316 = vunpack.c.l.b16 %v459
      %v1317 = vunpack.c.h.b16 %v459
      %v1318 = vunpack.c.l.b16 %v460
      %v1319 = vunpack.c.h.b16 %v460
      %v1320 = vunpack.c.l.b16 %v461
      %v1321 = vunpack.c.h.b16 %v461
      %v1322 = vunpack.c.l.b16 %v462
      %v1323 = vunpack.c.h.b16 %v462
      %v1324 = vunpack.c.l.b16 %v463
      %v1325 = vunpack.c.h.b16 %v463
      %v1326 = vunpack.c.l.b16 %v464
      %v1327 = vunpack.c.h.b16 %v464
      %v1328 = vunpack.c.l.b16 %v465
      %v1329 = vunpack.c.h.b16 %v465
      %v1330 = vunpack.c.l.b16 %v466
      %v1331 = vunpack.c.h.b16 %v466
      %v1332 = vunpack.c.l.b16 %v467
      %v1333 = vunpack.c.h.b16 %v467
      %v1334 = vunpack.c.l.b16 %v468
      %v1335 = vunpack.c.h.b16 %v468
      %v1336 = vunpack.c.l.b16 %v469
      %v1337 = vunpack.c.h.b16 %v469
      %v1338 = vunpack.c.l.b16 %v470
      %v1339 = vunpack.c.h.b16 %v470
      %v1340 = vunpack.c.l.b16 %v471
      %v1341 = vunpack.c.h.b16 %v471
      %v1342 = vunpack.c.l.b16 %v472
      %v1343 = vunpack.c.h.b16 %v472
      %v1344 = vunpack.c.l.b16 %v473
      %v1345 = vunpack.c.h.b16 %v473
      %v1346 = vunpack.c.l.b16 %v474
      %v1347 = vunpack.c.h.b16 %v474
      %v1348 = vunpack.c.l.b16 %v475
      %v1349 = vunpack.c.h.b16 %v475
      %v1350 = vunpack.c.l.b16 %v476
      %v1351 = vunpack.c.h.b16 %v476
      %v1352 = vunpack.c.l.b16 %v477
      %v1353 = vunpack.c.h.b16 %v477
      %v1354 = vunpack.c.l.b16 %v478
      %v1355 = vunpack.c.h.b16 %v478
      %v1356 = vunpack.c.l.b16 %v479
      %v1357 = vunpack.c.h.b16 %v479
      %v1358 = vunpack.c.l.b16 %v480
      %v1359 = vunpack.c.h.b16 %v480
      %v1360 = vunpack.c.l.b16 %v481
      %v1361 = vunpack.c.h.b16 %v481
      %v1362 = vunpack.c.l.b16 %v482
      %v1363 = vunpack.c.h.b16 %v482
      %v1364 = vunpack.c.l.b16 %v483
      %v1365 = vunpack.c.h.b16 %v483
      %v1366 = vunpack.c.l.b16 %v484
      %v1367 = vunpack.c.h.b16 %v484
      %v1368 = vunpack.c.l.b16 %v485
      %v1369 = vunpack.c.h.b16 %v485
      %v1370 = vunpack.c.l.b16 %v486
      %v1371 = vunpack.c.h.b16 %v486
      %v1372 = vunpack.c.l.b16 %v487
      %v1373 = vunpack.c.h.b16 %v487
      %v1374 = vunpack.c.l.b16 %v488
      %v1375 = vunpack.c.h.b16 %v488
      %v1376 = vunpack.c.l.b16 %v489
      %v1377 = vunpack.c.h.b16 %v489
      %v1378 = vunpack.c.l.b16 %v490
      %v1379 = vunpack.c.h.b16 %v490
      %v1380 = vunpack.c.l.b16 %v491
      %v1381 = vunpack.c.h.b16 %v491
      %v1382 = vpack.c.b16 %v994, %v990
      %v1383 = vpack.c.b16 %v995, %v991
      %v1384 = vpack.c.b16 %v996, %v992
      %v1385 = vpack.c.b16 %v997, %v993
      %v1386 = vpack.c.b16 %v1002, %v998
      %v1387 = vpack.c.b16 %v1003, %v999
      %v1388 = vpack.c.b16 %v1004, %v1000
      %v1389 = vpack.c.b16 %v1005, %v1001
      %v1390 = vpack.c.b16 %v1010, %v1006
      %v1391 = vpack.c.b16 %v1011, %v1007
      %v1392 = vpack.c.b16 %v1012, %v1008
      %v1393 = vpack.c.b16 %v1013, %v1009
      %v1394 = vpack.c.b16 %v1018, %v1014
      %v1395 = vpack.c.b16 %v1019, %v1015
      %v1396 = vpack.c.b16 %v1020, %v1016
      %v1397 = vpack.c.b16 %v1021, %v1017
      %v1398 = vpack.c.b16 %v1026, %v1022
      %v1399 = vpack.c.b16 %v1027, %v1023
      %v1400 = vpack.c.b16 %v1028, %v1024
      %v1401 = vpack.c.b16 %v1029, %v1025
      %v1402 = vpack.c.b16 %v1034, %v1030
      %v1403 = vpack.c.b16 %v1035, %v1031
      %v1404 = vpack.c.b16 %v1036, %v1032
      %v1405 = vpack.c.b16 %v1037, %v1033
      %v1406 = vpack.c.b16 %v1042, %v1038
      %v1407 = vpack.c.b16 %v1043, %v1039
      %v1408 = vpack.c.b16 %v1044, %v1040
      %v1409 = vpack.c.b16 %v1045, %v1041
      %v1410 = vpack.c.b16 %v1050, %v1046
      %v1411 = vpack.c.b16 %v1051, %v1047
      %v1412 = vpack.c.b16 %v1052, %v1048
      %v1413 = vpack.c.b16 %v1053, %v1049
      %v1414 = vpack.c.b16 %v1058, %v1054
      %v1415 = vpack.c.b16 %v1059, %v1055
      %v1416 = vpack.c.b16 %v1060, %v1056
      %v1417 = vpack.c.b16 %v1061, %v1057
      %v1418 = vpack.c.b16 %v1066, %v1062
      %v1419 = vpack.c.b16 %v1067, %v1063
      %v1420 = vpack.c.b16 %v1068, %v1064
      %v1421 = vpack.c.b16 %v1069, %v1065
      %v1422 = vpack.c.b16 %v1074, %v1070
      %v1423 = vpack.c.b16 %v1075, %v1071
      %v1424 = vpack.c.b16 %v1076, %v1072
      %v1425 = vpack.c.b16 %v1077, %v1073
      %v1426 = vpack.c.b16 %v1082, %v1078
      %v1427 = vpack.c.b16 %v1083, %v1079
      %v1428 = vpack.c.b16 %v1084, %v1080
      %v1429 = vpack.c.b16 %v1085, %v1081
      %v1430 = vpack.c.b16 %v1090, %v1086
      %v1431 = vpack.c.b16 %v1091, %v1087
      %v1432 = vpack.c.b16 %v1092, %v1088
      %v1433 = vpack.c.b16 %v1093, %v1089
      %v1434 = vpack.c.b16 %v1098, %v1094
      %v1435 = vpack.c.b16 %v1099, %v1095
      %v1436 = vpack.c.b16 %v1100, %v1096
      %v1437 = vpack.c.b16 %v1101, %v1097
      %v1438 = vpack.c.b16 %v1106, %v1102
      %v1439 = vpack.c.b16 %v1107, %v1103
      %v1440 = vpack.c.b16 %v1108, %v1104
      %v1441 = vpack.c.b16 %v1109, %v1105
      %v1442 = vpack.c.b16 %v1114, %v1110
      %v1443 = vpack.c.b16 %v1115, %v1111
      %v1444 = vpack.c.b16 %v1116, %v1112
      %v1445 = vpack.c.b16 %v1117, %v1113
      %v1446 = vpack.c.b16 %v1122, %v1118
      %v1447 = vpack.c.b16 %v1123, %v1119
      %v1448 = vpack.c.b16 %v1124, %v1120
      %v1449 = vpack.c.b16 %v1125, %v1121
      %v1450 = vpack.c.b16 %v1130, %v1126
      %v1451 = vpack.c.b16 %v1131, %v1127
      %v1452 = vpack.c.b16 %v1132, %v1128
      %v1453 = vpack.c.b16 %v1133, %v1129
      %v1454 = vpack.c.b16 %v1138, %v1134
      %v1455 = vpack.c.b16 %v1139, %v1135
      %v1456 = vpack.c.b16 %v1140, %v1136
      %v1457 = vpack.c.b16 %v1141, %v1137
      %v1458 = vpack.c.b16 %v1146, %v1142
      %v1459 = vpack.c.b16 %v1147, %v1143
      %v1460 = vpack.c.b16 %v1148, %v1144
      %v1461 = vpack.c.b16 %v1149, %v1145
      %v1462 = vpack.c.b16 %v1154, %v1150
      %v1463 = vpack.c.b16 %v1155, %v1151
      %v1464 = vpack.c.b16 %v1156, %v1152
      %v1465 = vpack.c.b16 %v1157, %v1153
      %v1466 = vpack.c.b16 %v1162, %v1158
      %v1467 = vpack.c.b16 %v1163, %v1159
      %v1468 = vpack.c.b16 %v1164, %v1160
      %v1469 = vpack.c.b16 %v1165, %v1161
      %v1470 = vpack.c.b16 %v1170, %v1166
      %v1471 = vpack.c.b16 %v1171, %v1167
      %v1472 = vpack.c.b16 %v1172, %v1168
      %v1473 = vpack.c.b16 %v1173, %v1169
      %v1474 = vpack.c.b16 %v1178, %v1174
      %v1475 = vpack.c.b16 %v1179, %v1175
      %v1476 = vpack.c.b16 %v1180, %v1176
      %v1477 = vpack.c.b16 %v1181, %v1177
      %v1478 = vpack.c.b16 %v1186, %v1182
      %v1479 = vpack.c.b16 %v1187, %v1183
      %v1480 = vpack.c.b16 %v1188, %v1184
      %v1481 = vpack.c.b16 %v1189, %v1185
      %v1482 = vpack.c.b16 %v1194, %v1190
      %v1483 = vpack.c.b16 %v1195, %v1191
      %v1484 = vpack.c.b16 %v1196, %v1192
      %v1485 = vpack.c.b16 %v1197, %v1193
      %v1486 = vpack.c.b16 %v1202, %v1198
      %v1487 = vpack.c.b16 %v1203, %v1199
      %v1488 = vpack.c.b16 %v1204, %v1200
      %v1489 = vpack.c.b16 %v1205, %v1201
      %v1490 = vpack.c.b16 %v1210, %v1206
      %v1491 = vpack.c.b16 %v1211, %v1207
      %v1492 = vpack.c.b16 %v1212, %v1208
      %v1493 = vpack.c.b16 %v1213, %v1209
      %v1494 = vpack.c.b16 %v1218, %v1214
      %v1495 = vpack.c.b16 %v1219, %v1215
      %v1496 = vpack.c.b16 %v1220, %v1216
      %v1497 = vpack.c.b16 %v1221, %v1217
      %v1498 = vpack.c.b16 %v1226, %v1222
      %v1499 = vpack.c.b16 %v1227, %v1223
      %v1500 = vpack.c.b16 %v1228, %v1224
      %v1501 = vpack.c.b16 %v1229, %v1225
      %v1502 = vpack.c.b16 %v1234, %v1230
      %v1503 = vpack.c.b16 %v1235, %v1231
      %v1504 = vpack.c.b16 %v1236, %v1232
      %v1505 = vpack.c.b16 %v1237, %v1233
      %v1506 = vpack.c.b16 %v1242, %v1238
      %v1507 = vpack.c.b16 %v1243, %v1239
      %v1508 = vpack.c.b16 %v1244, %v1240
      %v1509 = vpack.c.b16 %v1245, %v1241
      %v1510 = vpack.c.b16 %v1250, %v1246
      %v1511 = vpack.c.b16 %v1251, %v1247
      %v1512 = vpack.c.b16 %v1252, %v1248
      %v1513 = vpack.c.b16 %v1253, %v1249
      %v1514 = vpack.c.b16 %v1258, %v1254
      %v1515 = vpack.c.b16 %v1259, %v1255
      %v1516 = vpack.c.b16 %v1260, %v1256
      %v1517 = vpack.c.b16 %v1261, %v1257
      %v1518 = vpack.c.b16 %v1266, %v1262
      %v1519 = vpack.c.b16 %v1267, %v1263
      %v1520 = vpack.c.b16 %v1268, %v1264
      %v1521 = vpack.c.b16 %v1269, %v1265
      %v1522 = vpack.c.b16 %v1274, %v1270
      %v1523 = vpack.c.b16 %v1275, %v1271
      %v1524 = vpack.c.b16 %v1276, %v1272
      %v1525 = vpack.c.b16 %v1277, %v1273
      %v1526 = vpack.c.b16 %v1282, %v1278
      %v1527 = vpack.c.b16 %v1283, %v1279
      %v1528 = vpack.c.b16 %v1284, %v1280
      %v1529 = vpack.c.b16 %v1285, %v1281
      %v1530 = vpack.c.b16 %v1290, %v1286
      %v1531 = vpack.c.b16 %v1291, %v1287
      %v1532 = vpack.c.b16 %v1292, %v1288
      %v1533 = vpack.c.b16 %v1293, %v1289
      %v1534 = vpack.c.b16 %v1298, %v1294
      %v1535 = vpack.c.b16 %v1299, %v1295
      %v1536 = vpack.c.b16 %v1300, %v1296
      %v1537 = vpack.c.b16 %v1301, %v1297
      %v1538 = vpack.c.b16 %v1306, %v1302
      %v1539 = vpack.c.b16 %v1307, %v1303
      %v1540 = vpack.c.b16 %v1308, %v1304
      %v1541 = vpack.c.b16 %v1309, %v1305
      %v1542 = vpack.c.b16 %v1314, %v1310
      %v1543 = vpack.c.b16 %v1315, %v1311
      %v1544 = vpack.c.b16 %v1316, %v1312
      %v1545 = vpack.c.b16 %v1317, %v1313
      %v1546 = vpack.c.b16 %v1322, %v1318
      %v1547 = vpack.c.b16 %v1323, %v1319
      %v1548 = vpack.c.b16 %v1324, %v1320
      %v1549 = vpack.c.b16 %v1325, %v1321
      %v1550 = vpack.c.b16 %v1330, %v1326
      %v1551 = vpack.c.b16 %v1331, %v1327
      %v1552 = vpack.c.b16 %v1332, %v1328
      %v1553 = vpack.c.b16 %v1333, %v1329
      %v1554 = vpack.c.b16 %v1338, %v1334
      %v1555 = vpack.c.b16 %v1339, %v1335
      %v1556 = vpack.c.b16 %v1340, %v1336
      %v1557 = vpack.c.b16 %v1341, %v1337
      %v1558 = vpack.c.b16 %v1346, %v1342
      %v1559 = vpack.c.b16 %v1347, %v1343
      %v1560 = vpack.c.b16 %v1348, %v1344
      %v1561 = vpack.c.b16 %v1349, %v1345
      %v1562 = vpack.c.b16 %v1354, %v1350
      %v1563 = vpack.c.b16 %v1355, %v1351
      %v1564 = vpack.c.b16 %v1356, %v1352
      %v1565 = vpack.c.b16 %v1357, %v1353
      %v1566 = vpack.c.b16 %v1362, %v1358
      %v1567 = vpack.c.b16 %v1363, %v1359
      %v1568 = vpack.c.b16 %v1364, %v1360
      %v1569 = vpack.c.b16 %v1365, %v1361
      %v1570 = vpack.c.b16 %v1370, %v1366
      %v1571 = vpack.c.b16 %v1371, %v1367
      %v1572 = vpack.c.b16 %v1372, %v1368
      %v1573 = vpack.c.b16 %v1373, %v1369
      %v1574 = vpack.c.b16 %v1378, %v1374
      %v1575 = vpack.c.b16 %v1379, %v1375
      %v1576 = vpack.c.b16 %v1380, %v1376
      %v1577 = vpack.c.b16 %v1381, %v1377
      %vm1774 = vcmask 130048
      %v1776 = vsel %vm1774, %v696, 0
      %v1779 = vsel %vm1774, %v703, 0
      %v1782 = vsel %vm1774, %v710, 0
      %v1785 = vsel %vm1774, %v717, 0
      %v1788 = vsel %vm1774, %v724, 0
      %v1791 = vsel %vm1774, %v731, 0
      %v1794 = vsel %vm1774, %v738, 0
      %v1797 = vsel %vm1774, %v745, 0
      %1799 = vmatprep.subr.bf16.mxu0 %v1411
      %1800 = vmatpush1.bf16.msra.mxu0 %v1410
      %1801 = vmatprep.subr.bf16.mxu0 %v1407
      %1802 = vmatpush1.bf16.msra.mxu0 %v1406
      %1803 = vmatprep.subr.bf16.mxu0 %v1403
      %1804 = vmatpush1.bf16.msra.mxu0 %v1402
      %1805 = vmatprep.subr.bf16.mxu0 %v1399
      %1806 = vmatpush1.bf16.msra.mxu0 %v1398
      %1807 = vmatprep.subr.bf16.mxu0 %v1395
      %1808 = vmatpush1.bf16.msra.mxu0 %v1394
      %1809 = vmatprep.subr.bf16.mxu0 %v1391
      %1810 = vmatpush1.bf16.msra.mxu0 %v1390
      %1811 = vmatprep.subr.bf16.mxu0 %v1387
      %1812 = vmatpush1.bf16.msra.mxu0 %v1386
      %1813 = vmatprep.subr.bf16.mxu0 %v1383
      %1814 = vmatpush1.bf16.msra.mxu0 %v1382
      %1815 = vmatprep.subr.bf16.mxu0 %v1443
      %1816 = vmatpush2.bf16.msra.mxu0 %v1442
      %1817 = vmatprep.subr.bf16.mxu0 %v1439
      %1818 = vmatpush2.bf16.msra.mxu0 %v1438
      %1819 = vmatprep.subr.bf16.mxu0 %v1435
      %1820 = vmatpush2.bf16.msra.mxu0 %v1434
      %1821 = vmatprep.subr.bf16.mxu0 %v1431
      %1822 = vmatpush2.bf16.msra.mxu0 %v1430
      %1823 = vmatprep.subr.bf16.mxu0 %v1427
      %1824 = vmatpush2.bf16.msra.mxu0 %v1426
      %1825 = vmatprep.subr.bf16.mxu0 %v1423
      %1826 = vmatpush2.bf16.msra.mxu0 %v1422
      %1827 = vmatprep.subr.bf16.mxu0 %v1419
      %1828 = vmatpush2.bf16.msra.mxu0 %v1418
      %1829 = vmatprep.subr.bf16.mxu0 %v1415
      %1830 = vmatpush2.bf16.msra.mxu0 %v1414
      %1831 = vmatprep.mubr.bf16.mxu0 %v691
      %1832 = vmatmul.mubr.bf16.gmra.mxu0 %v690
      %v1833 = vpop.f32.mrf.mxu0
      %v1834 = vadd.f32 %v497, %v1833
      %v1835 = vpop.f32.mrf.mxu0
      %v1836 = vadd.f32 %v501, %v1835
      %v1837 = vpop.f32.mrf.mxu0
      %v1838 = vadd.f32 %v497, %v1837
      %v1839 = vpop.f32.mrf.mxu0
      %v1840 = vadd.f32 %v501, %v1839
      %1841 = vmatprep.mubr.bf16.mxu0 %v698
      %1842 = vmatmul.mubr.bf16.gmra.mxu0 %v697
      %v1843 = vpop.f32.mrf.mxu0
      %v1844 = vadd.f32 %v497, %v1843
      %v1845 = vpop.f32.mrf.mxu0
      %v1846 = vadd.f32 %v501, %v1845
      %v1847 = vpop.f32.mrf.mxu0
      %v1848 = vadd.f32 %v497, %v1847
      %v1849 = vpop.f32.mrf.mxu0
      %v1850 = vadd.f32 %v501, %v1849
      %1851 = vmatprep.mubr.bf16.mxu0 %v705
      %1852 = vmatmul.mubr.bf16.gmra.mxu0 %v704
      %v1853 = vpop.f32.mrf.mxu0
      %v1854 = vadd.f32 %v497, %v1853
      %v1855 = vpop.f32.mrf.mxu0
      %v1856 = vadd.f32 %v501, %v1855
      %v1857 = vpop.f32.mrf.mxu0
      %v1858 = vadd.f32 %v497, %v1857
      %v1859 = vpop.f32.mrf.mxu0
      %v1860 = vadd.f32 %v501, %v1859
      %1861 = vmatprep.mubr.bf16.mxu0 %v712
      %1862 = vmatmul.mubr.bf16.gmra.mxu0 %v711
      %v1863 = vpop.f32.mrf.mxu0
      %v1864 = vadd.f32 %v497, %v1863
      %v1865 = vpop.f32.mrf.mxu0
      %v1866 = vadd.f32 %v501, %v1865
      %v1867 = vpop.f32.mrf.mxu0
      %v1868 = vadd.f32 %v497, %v1867
      %v1869 = vpop.f32.mrf.mxu0
      %v1870 = vadd.f32 %v501, %v1869
      %1871 = vmatprep.mubr.bf16.mxu0 %v719
      %1872 = vmatmul.mubr.bf16.gmra.mxu0 %v718
      %v1873 = vpop.f32.mrf.mxu0
      %v1874 = vadd.f32 %v497, %v1873
      %v1875 = vpop.f32.mrf.mxu0
      %v1876 = vadd.f32 %v501, %v1875
      %v1877 = vpop.f32.mrf.mxu0
      %v1878 = vadd.f32 %v497, %v1877
      %v1879 = vpop.f32.mrf.mxu0
      %v1880 = vadd.f32 %v501, %v1879
      %1881 = vmatprep.mubr.bf16.mxu0 %v726
      %1882 = vmatmul.mubr.bf16.gmra.mxu0 %v725
      %v1883 = vpop.f32.mrf.mxu0
      %v1884 = vadd.f32 %v497, %v1883
      %v1885 = vpop.f32.mrf.mxu0
      %v1886 = vadd.f32 %v501, %v1885
      %v1887 = vpop.f32.mrf.mxu0
      %v1888 = vadd.f32 %v497, %v1887
      %v1889 = vpop.f32.mrf.mxu0
      %v1890 = vadd.f32 %v501, %v1889
      %1891 = vmatprep.mubr.bf16.mxu0 %v733
      %1892 = vmatmul.mubr.bf16.gmra.mxu0 %v732
      %v1893 = vpop.f32.mrf.mxu0
      %v1894 = vadd.f32 %v497, %v1893
      %v1895 = vpop.f32.mrf.mxu0
      %v1896 = vadd.f32 %v501, %v1895
      %v1897 = vpop.f32.mrf.mxu0
      %v1898 = vadd.f32 %v497, %v1897
      %v1899 = vpop.f32.mrf.mxu0
      %v1900 = vadd.f32 %v501, %v1899
      %1901 = vmatprep.mubr.bf16.mxu0 %v740
      %1902 = vmatmul.mubr.bf16.gmra.mxu0 %v739
      %v1903 = vpop.f32.mrf.mxu0
      %v1904 = vadd.f32 %v497, %v1903
      %v1905 = vpop.f32.mrf.mxu0
      %v1906 = vadd.f32 %v501, %v1905
      %v1907 = vpop.f32.mrf.mxu0
      %v1908 = vadd.f32 %v497, %v1907
      %v1909 = vpop.f32.mrf.mxu0
      %v1910 = vadd.f32 %v501, %v1909
      %1911 = vdwg.mxu0
      %1912 = vmatprep.subr.bf16.mxu0 %v1475
      %1913 = vmatpush1.bf16.msra.mxu0 %v1474
      %1914 = vmatprep.subr.bf16.mxu0 %v1471
      %1915 = vmatpush1.bf16.msra.mxu0 %v1470
      %1916 = vmatprep.subr.bf16.mxu0 %v1467
      %1917 = vmatpush1.bf16.msra.mxu0 %v1466
      %1918 = vmatprep.subr.bf16.mxu0 %v1463
      %1919 = vmatpush1.bf16.msra.mxu0 %v1462
      %1920 = vmatprep.subr.bf16.mxu0 %v1459
      %1921 = vmatpush1.bf16.msra.mxu0 %v1458
      %1922 = vmatprep.subr.bf16.mxu0 %v1455
      %1923 = vmatpush1.bf16.msra.mxu0 %v1454
      %1924 = vmatprep.subr.bf16.mxu0 %v1451
      %1925 = vmatpush1.bf16.msra.mxu0 %v1450
      %1926 = vmatprep.subr.bf16.mxu0 %v1447
      %1927 = vmatpush1.bf16.msra.mxu0 %v1446
      %1928 = vmatprep.subr.bf16.mxu0 %v1507
      %1929 = vmatpush2.bf16.msra.mxu0 %v1506
      %1930 = vmatprep.subr.bf16.mxu0 %v1503
      %1931 = vmatpush2.bf16.msra.mxu0 %v1502
      %1932 = vmatprep.subr.bf16.mxu0 %v1499
      %1933 = vmatpush2.bf16.msra.mxu0 %v1498
      %1934 = vmatprep.subr.bf16.mxu0 %v1495
      %1935 = vmatpush2.bf16.msra.mxu0 %v1494
      %1936 = vmatprep.subr.bf16.mxu0 %v1491
      %1937 = vmatpush2.bf16.msra.mxu0 %v1490
      %1938 = vmatprep.subr.bf16.mxu0 %v1487
      %1939 = vmatpush2.bf16.msra.mxu0 %v1486
      %1940 = vmatprep.subr.bf16.mxu0 %v1483
      %1941 = vmatpush2.bf16.msra.mxu0 %v1482
      %1942 = vmatprep.subr.bf16.mxu0 %v1479
      %1943 = vmatpush2.bf16.msra.mxu0 %v1478
      %1944 = vmatprep.mubr.bf16.mxu0 %v693
      %1945 = vmatmul.mubr.bf16.gmra.mxu0 %v692
      %v1946 = vpop.f32.mrf.mxu0
      %v1947 = vadd.f32 %v1834, %v1946
      %v1948 = vpop.f32.mrf.mxu0
      %v1949 = vadd.f32 %v1836, %v1948
      %v1950 = vpop.f32.mrf.mxu0
      %v1951 = vadd.f32 %v1838, %v1950
      %v1952 = vpop.f32.mrf.mxu0
      %v1953 = vadd.f32 %v1840, %v1952
      %1954 = vmatprep.mubr.bf16.mxu0 %v700
      %1955 = vmatmul.mubr.bf16.gmra.mxu0 %v699
      %v1956 = vpop.f32.mrf.mxu0
      %v1957 = vadd.f32 %v1844, %v1956
      %v1958 = vpop.f32.mrf.mxu0
      %v1959 = vadd.f32 %v1846, %v1958
      %v1960 = vpop.f32.mrf.mxu0
      %v1961 = vadd.f32 %v1848, %v1960
      %v1962 = vpop.f32.mrf.mxu0
      %v1963 = vadd.f32 %v1850, %v1962
      %1964 = vmatprep.mubr.bf16.mxu0 %v707
      %1965 = vmatmul.mubr.bf16.gmra.mxu0 %v706
      %v1966 = vpop.f32.mrf.mxu0
      %v1967 = vadd.f32 %v1854, %v1966
      %v1968 = vpop.f32.mrf.mxu0
      %v1969 = vadd.f32 %v1856, %v1968
      %v1970 = vpop.f32.mrf.mxu0
      %v1971 = vadd.f32 %v1858, %v1970
      %v1972 = vpop.f32.mrf.mxu0
      %v1973 = vadd.f32 %v1860, %v1972
      %1974 = vmatprep.mubr.bf16.mxu0 %v714
      %1975 = vmatmul.mubr.bf16.gmra.mxu0 %v713
      %v1976 = vpop.f32.mrf.mxu0
      %v1977 = vadd.f32 %v1864, %v1976
      %v1978 = vpop.f32.mrf.mxu0
      %v1979 = vadd.f32 %v1866, %v1978
      %v1980 = vpop.f32.mrf.mxu0
      %v1981 = vadd.f32 %v1868, %v1980
      %v1982 = vpop.f32.mrf.mxu0
      %v1983 = vadd.f32 %v1870, %v1982
      %1984 = vmatprep.mubr.bf16.mxu0 %v721
      %1985 = vmatmul.mubr.bf16.gmra.mxu0 %v720
      %v1986 = vpop.f32.mrf.mxu0
      %v1987 = vadd.f32 %v1874, %v1986
      %v1988 = vpop.f32.mrf.mxu0
      %v1989 = vadd.f32 %v1876, %v1988
      %v1990 = vpop.f32.mrf.mxu0
      %v1991 = vadd.f32 %v1878, %v1990
      %v1992 = vpop.f32.mrf.mxu0
      %v1993 = vadd.f32 %v1880, %v1992
      %1994 = vmatprep.mubr.bf16.mxu0 %v728
      %1995 = vmatmul.mubr.bf16.gmra.mxu0 %v727
      %v1996 = vpop.f32.mrf.mxu0
      %v1997 = vadd.f32 %v1884, %v1996
      %v1998 = vpop.f32.mrf.mxu0
      %v1999 = vadd.f32 %v1886, %v1998
      %v2000 = vpop.f32.mrf.mxu0
      %v2001 = vadd.f32 %v1888, %v2000
      %v2002 = vpop.f32.mrf.mxu0
      %v2003 = vadd.f32 %v1890, %v2002
      %2004 = vmatprep.mubr.bf16.mxu0 %v735
      %2005 = vmatmul.mubr.bf16.gmra.mxu0 %v734
      %v2006 = vpop.f32.mrf.mxu0
      %v2007 = vadd.f32 %v1894, %v2006
      %v2008 = vpop.f32.mrf.mxu0
      %v2009 = vadd.f32 %v1896, %v2008
      %v2010 = vpop.f32.mrf.mxu0
      %v2011 = vadd.f32 %v1898, %v2010
      %v2012 = vpop.f32.mrf.mxu0
      %v2013 = vadd.f32 %v1900, %v2012
      %2014 = vmatprep.mubr.bf16.mxu0 %v742
      %2015 = vmatmul.mubr.bf16.gmra.mxu0 %v741
      %v2016 = vpop.f32.mrf.mxu0
      %v2017 = vadd.f32 %v1904, %v2016
      %v2018 = vpop.f32.mrf.mxu0
      %v2019 = vadd.f32 %v1906, %v2018
      %v2020 = vpop.f32.mrf.mxu0
      %v2021 = vadd.f32 %v1908, %v2020
      %v2022 = vpop.f32.mrf.mxu0
      %v2023 = vadd.f32 %v1910, %v2022
      %2024 = vdwg.mxu0
      %2025 = vmatprep.subr.bf16.mxu0 %v1539
      %2026 = vmatpush1.bf16.msra.mxu0 %v1538
      %2027 = vmatprep.subr.bf16.mxu0 %v1535
      %2028 = vmatpush1.bf16.msra.mxu0 %v1534
      %2029 = vmatprep.subr.bf16.mxu0 %v1531
      %2030 = vmatpush1.bf16.msra.mxu0 %v1530
      %2031 = vmatprep.subr.bf16.mxu0 %v1527
      %2032 = vmatpush1.bf16.msra.mxu0 %v1526
      %2033 = vmatprep.subr.bf16.mxu0 %v1523
      %2034 = vmatpush1.bf16.msra.mxu0 %v1522
      %2035 = vmatprep.subr.bf16.mxu0 %v1519
      %2036 = vmatpush1.bf16.msra.mxu0 %v1518
      %2037 = vmatprep.subr.bf16.mxu0 %v1515
      %2038 = vmatpush1.bf16.msra.mxu0 %v1514
      %2039 = vmatprep.subr.bf16.mxu0 %v1511
      %2040 = vmatpush1.bf16.msra.mxu0 %v1510
      %2041 = vmatprep.subr.bf16.mxu0 %v1571
      %2042 = vmatpush2.bf16.msra.mxu0 %v1570
      %2043 = vmatprep.subr.bf16.mxu0 %v1567
      %2044 = vmatpush2.bf16.msra.mxu0 %v1566
      %2045 = vmatprep.subr.bf16.mxu0 %v1563
      %2046 = vmatpush2.bf16.msra.mxu0 %v1562
      %2047 = vmatprep.subr.bf16.mxu0 %v1559
      %2048 = vmatpush2.bf16.msra.mxu0 %v1558
      %2049 = vmatprep.subr.bf16.mxu0 %v1555
      %2050 = vmatpush2.bf16.msra.mxu0 %v1554
      %2051 = vmatprep.subr.bf16.mxu0 %v1551
      %2052 = vmatpush2.bf16.msra.mxu0 %v1550
      %2053 = vmatprep.subr.bf16.mxu0 %v1547
      %2054 = vmatpush2.bf16.msra.mxu0 %v1546
      %2055 = vmatprep.subr.bf16.mxu0 %v1543
      %2056 = vmatpush2.bf16.msra.mxu0 %v1542
      %2057 = vmatprep.mubr.bf16.mxu0 %v695
      %2058 = vmatmul.mubr.bf16.gmra.mxu0 %v694
      %v2059 = vpop.f32.mrf.mxu0
      %v2060 = vadd.f32 %v1947, %v2059
      %v2061 = vpop.f32.mrf.mxu0
      %v2062 = vadd.f32 %v1949, %v2061
      %v2063 = vpop.f32.mrf.mxu0
      %v2064 = vadd.f32 %v1951, %v2063
      %v2065 = vpop.f32.mrf.mxu0
      %v2066 = vadd.f32 %v1953, %v2065
      %2067 = vmatprep.mubr.bf16.mxu0 %v702
      %2068 = vmatmul.mubr.bf16.gmra.mxu0 %v701
      %v2069 = vpop.f32.mrf.mxu0
      %v2070 = vadd.f32 %v1957, %v2069
      %v2071 = vpop.f32.mrf.mxu0
      %v2072 = vadd.f32 %v1959, %v2071
      %v2073 = vpop.f32.mrf.mxu0
      %v2074 = vadd.f32 %v1961, %v2073
      %v2075 = vpop.f32.mrf.mxu0
      %v2076 = vadd.f32 %v1963, %v2075
      %2077 = vmatprep.mubr.bf16.mxu0 %v709
      %2078 = vmatmul.mubr.bf16.gmra.mxu0 %v708
      %v2079 = vpop.f32.mrf.mxu0
      %v2080 = vadd.f32 %v1967, %v2079
      %v2081 = vpop.f32.mrf.mxu0
      %v2082 = vadd.f32 %v1969, %v2081
      %v2083 = vpop.f32.mrf.mxu0
      %v2084 = vadd.f32 %v1971, %v2083
      %v2085 = vpop.f32.mrf.mxu0
      %v2086 = vadd.f32 %v1973, %v2085
      %2087 = vmatprep.mubr.bf16.mxu0 %v716
      %2088 = vmatmul.mubr.bf16.gmra.mxu0 %v715
      %v2089 = vpop.f32.mrf.mxu0
      %v2090 = vadd.f32 %v1977, %v2089
      %v2091 = vpop.f32.mrf.mxu0
      %v2092 = vadd.f32 %v1979, %v2091
      %v2093 = vpop.f32.mrf.mxu0
      %v2094 = vadd.f32 %v1981, %v2093
      %v2095 = vpop.f32.mrf.mxu0
      %v2096 = vadd.f32 %v1983, %v2095
      %2097 = vmatprep.mubr.bf16.mxu0 %v723
      %2098 = vmatmul.mubr.bf16.gmra.mxu0 %v722
      %v2099 = vpop.f32.mrf.mxu0
      %v2100 = vadd.f32 %v1987, %v2099
      %v2101 = vpop.f32.mrf.mxu0
      %v2102 = vadd.f32 %v1989, %v2101
      %v2103 = vpop.f32.mrf.mxu0
      %v2104 = vadd.f32 %v1991, %v2103
      %v2105 = vpop.f32.mrf.mxu0
      %v2106 = vadd.f32 %v1993, %v2105
      %2107 = vmatprep.mubr.bf16.mxu0 %v730
      %2108 = vmatmul.mubr.bf16.gmra.mxu0 %v729
      %v2109 = vpop.f32.mrf.mxu0
      %v2110 = vadd.f32 %v1997, %v2109
      %v2111 = vpop.f32.mrf.mxu0
      %v2112 = vadd.f32 %v1999, %v2111
      %v2113 = vpop.f32.mrf.mxu0
      %v2114 = vadd.f32 %v2001, %v2113
      %v2115 = vpop.f32.mrf.mxu0
      %v2116 = vadd.f32 %v2003, %v2115
      %2117 = vmatprep.mubr.bf16.mxu0 %v737
      %2118 = vmatmul.mubr.bf16.gmra.mxu0 %v736
      %v2119 = vpop.f32.mrf.mxu0
      %v2120 = vadd.f32 %v2007, %v2119
      %v2121 = vpop.f32.mrf.mxu0
      %v2122 = vadd.f32 %v2009, %v2121
      %v2123 = vpop.f32.mrf.mxu0
      %v2124 = vadd.f32 %v2011, %v2123
      %v2125 = vpop.f32.mrf.mxu0
      %v2126 = vadd.f32 %v2013, %v2125
      %2127 = vmatprep.mubr.bf16.mxu0 %v744
      %2128 = vmatmul.mubr.bf16.gmra.mxu0 %v743
      %v2129 = vpop.f32.mrf.mxu0
      %v2130 = vadd.f32 %v2017, %v2129
      %v2131 = vpop.f32.mrf.mxu0
      %v2132 = vadd.f32 %v2019, %v2131
      %v2133 = vpop.f32.mrf.mxu0
      %v2134 = vadd.f32 %v2021, %v2133
      %v2135 = vpop.f32.mrf.mxu0
      %v2136 = vadd.f32 %v2023, %v2135
      %2137 = vdwg.mxu0
      %2138 = vmatprep.subr.bf16.mxu0 0
      %2139 = vmatpush1.bf16.msra.mxu0 0
      %2140 = vmatprep.subr.bf16.mxu0 0
      %2141 = vmatpush1.bf16.msra.mxu0 0
      %2142 = vmatprep.subr.bf16.mxu0 0
      %2143 = vmatpush1.bf16.msra.mxu0 0
      %2144 = vmatprep.subr.bf16.mxu0 0
      %2145 = vmatpush1.bf16.msra.mxu0 0
      %2146 = vmatprep.subr.bf16.mxu0 0
      %2147 = vmatpush1.bf16.msra.mxu0 0
      %2148 = vmatprep.subr.bf16.mxu0 0
      %2149 = vmatpush1.bf16.msra.mxu0 0
      %2150 = vmatprep.subr.bf16.mxu0 0
      %2151 = vmatpush1.bf16.msra.mxu0 0
      %2152 = vmatprep.subr.bf16.mxu0 %v1575
      %2153 = vmatpush1.bf16.msra.mxu0 %v1574
      %2154 = vmatprep.subr.bf16.mxu0 0
      %2155 = vmatpush2.bf16.msra.mxu0 0
      %2156 = vmatprep.subr.bf16.mxu0 0
      %2157 = vmatpush2.bf16.msra.mxu0 0
      %2158 = vmatprep.subr.bf16.mxu0 0
      %2159 = vmatpush2.bf16.msra.mxu0 0
      %2160 = vmatprep.subr.bf16.mxu0 0
      %2161 = vmatpush2.bf16.msra.mxu0 0
      %2162 = vmatprep.subr.bf16.mxu0 0
      %2163 = vmatpush2.bf16.msra.mxu0 0
      %2164 = vmatprep.subr.bf16.mxu0 0
      %2165 = vmatpush2.bf16.msra.mxu0 0
      %2166 = vmatprep.subr.bf16.mxu0 0
      %2167 = vmatpush2.bf16.msra.mxu0 0
      %2168 = vmatprep.subr.bf16.mxu0 0
      %2169 = vmatpush2.bf16.msra.mxu0 0
      %2170 = vmatprep.mubr.bf16.mxu0 0
      %2171 = vmatmul.mubr.bf16.gmra.mxu0 %v1776
      %v2172 = vpop.f32.mrf.mxu0
      %v2173 = vadd.f32 %v2060, %v2172
      %v2174 = vpop.f32.mrf.mxu0
      %v2175 = vadd.f32 %v2062, %v2174
      %v2176 = vpop.f32.mrf.mxu0
      %v2177 = vadd.f32 %v2064, %v2176
      %v2178 = vpop.f32.mrf.mxu0
      %v2179 = vadd.f32 %v2066, %v2178
      %2180 = vmatprep.mubr.bf16.mxu0 0
      %2181 = vmatmul.mubr.bf16.gmra.mxu0 %v1779
      %v2182 = vpop.f32.mrf.mxu0
      %v2183 = vadd.f32 %v2070, %v2182
      %v2184 = vpop.f32.mrf.mxu0
      %v2185 = vadd.f32 %v2072, %v2184
      %v2186 = vpop.f32.mrf.mxu0
      %v2187 = vadd.f32 %v2074, %v2186
      %v2188 = vpop.f32.mrf.mxu0
      %v2189 = vadd.f32 %v2076, %v2188
      %2190 = vmatprep.mubr.bf16.mxu0 0
      %2191 = vmatmul.mubr.bf16.gmra.mxu0 %v1782
      %v2192 = vpop.f32.mrf.mxu0
      %v2193 = vadd.f32 %v2080, %v2192
      %v2194 = vpop.f32.mrf.mxu0
      %v2195 = vadd.f32 %v2082, %v2194
      %v2196 = vpop.f32.mrf.mxu0
      %v2197 = vadd.f32 %v2084, %v2196
      %v2198 = vpop.f32.mrf.mxu0
      %v2199 = vadd.f32 %v2086, %v2198
      %2200 = vmatprep.mubr.bf16.mxu0 0
      %2201 = vmatmul.mubr.bf16.gmra.mxu0 %v1785
      %v2202 = vpop.f32.mrf.mxu0
      %v2203 = vadd.f32 %v2090, %v2202
      %v2204 = vpop.f32.mrf.mxu0
      %v2205 = vadd.f32 %v2092, %v2204
      %v2206 = vpop.f32.mrf.mxu0
      %v2207 = vadd.f32 %v2094, %v2206
      %v2208 = vpop.f32.mrf.mxu0
      %v2209 = vadd.f32 %v2096, %v2208
      %2210 = vmatprep.mubr.bf16.mxu0 0
      %2211 = vmatmul.mubr.bf16.gmra.mxu0 %v1788
      %v2212 = vpop.f32.mrf.mxu0
      %v2213 = vadd.f32 %v2100, %v2212
      %v2214 = vpop.f32.mrf.mxu0
      %v2215 = vadd.f32 %v2102, %v2214
      %v2216 = vpop.f32.mrf.mxu0
      %v2217 = vadd.f32 %v2104, %v2216
      %v2218 = vpop.f32.mrf.mxu0
      %v2219 = vadd.f32 %v2106, %v2218
      %2220 = vmatprep.mubr.bf16.mxu0 0
      %2221 = vmatmul.mubr.bf16.gmra.mxu0 %v1791
      %v2222 = vpop.f32.mrf.mxu0
      %v2223 = vadd.f32 %v2110, %v2222
      %v2224 = vpop.f32.mrf.mxu0
      %v2225 = vadd.f32 %v2112, %v2224
      %v2226 = vpop.f32.mrf.mxu0
      %v2227 = vadd.f32 %v2114, %v2226
      %v2228 = vpop.f32.mrf.mxu0
      %v2229 = vadd.f32 %v2116, %v2228
      %2230 = vmatprep.mubr.bf16.mxu0 0
      %2231 = vmatmul.mubr.bf16.gmra.mxu0 %v1794
      %v2232 = vpop.f32.mrf.mxu0
      %v2233 = vadd.f32 %v2120, %v2232
      %v2234 = vpop.f32.mrf.mxu0
      %v2235 = vadd.f32 %v2122, %v2234
      %v2236 = vpop.f32.mrf.mxu0
      %v2237 = vadd.f32 %v2124, %v2236
      %v2238 = vpop.f32.mrf.mxu0
      %v2239 = vadd.f32 %v2126, %v2238
      %2240 = vmatprep.mubr.bf16.mxu0 0
      %2241 = vmatmul.mubr.bf16.gmra.mxu0 %v1797
      %v2242 = vpop.f32.mrf.mxu0
      %v2243 = vadd.f32 %v2130, %v2242
      %v2244 = vpop.f32.mrf.mxu0
      %v2245 = vadd.f32 %v2132, %v2244
      %v2246 = vpop.f32.mrf.mxu0
      %v2247 = vadd.f32 %v2134, %v2246
      %v2248 = vpop.f32.mrf.mxu0
      %v2249 = vadd.f32 %v2136, %v2248
      %2250 = vdwg.mxu0
      %2251 = vmatprep.subr.bf16.mxu0 %v1413
      %2252 = vmatpush1.bf16.msra.mxu0 %v1412
      %2253 = vmatprep.subr.bf16.mxu0 %v1409
      %2254 = vmatpush1.bf16.msra.mxu0 %v1408
      %2255 = vmatprep.subr.bf16.mxu0 %v1405
      %2256 = vmatpush1.bf16.msra.mxu0 %v1404
      %2257 = vmatprep.subr.bf16.mxu0 %v1401
      %2258 = vmatpush1.bf16.msra.mxu0 %v1400
      %2259 = vmatprep.subr.bf16.mxu0 %v1397
      %2260 = vmatpush1.bf16.msra.mxu0 %v1396
      %2261 = vmatprep.subr.bf16.mxu0 %v1393
      %2262 = vmatpush1.bf16.msra.mxu0 %v1392
      %2263 = vmatprep.subr.bf16.mxu0 %v1389
      %2264 = vmatpush1.bf16.msra.mxu0 %v1388
      %2265 = vmatprep.subr.bf16.mxu0 %v1385
      %2266 = vmatpush1.bf16.msra.mxu0 %v1384
      %2267 = vmatprep.subr.bf16.mxu0 %v1445
      %2268 = vmatpush2.bf16.msra.mxu0 %v1444
      %2269 = vmatprep.subr.bf16.mxu0 %v1441
      %2270 = vmatpush2.bf16.msra.mxu0 %v1440
      %2271 = vmatprep.subr.bf16.mxu0 %v1437
      %2272 = vmatpush2.bf16.msra.mxu0 %v1436
      %2273 = vmatprep.subr.bf16.mxu0 %v1433
      %2274 = vmatpush2.bf16.msra.mxu0 %v1432
      %2275 = vmatprep.subr.bf16.mxu0 %v1429
      %2276 = vmatpush2.bf16.msra.mxu0 %v1428
      %2277 = vmatprep.subr.bf16.mxu0 %v1425
      %2278 = vmatpush2.bf16.msra.mxu0 %v1424
      %2279 = vmatprep.subr.bf16.mxu0 %v1421
      %2280 = vmatpush2.bf16.msra.mxu0 %v1420
      %2281 = vmatprep.subr.bf16.mxu0 %v1417
      %2282 = vmatpush2.bf16.msra.mxu0 %v1416
      %2283 = vmatprep.mubr.bf16.mxu0 %v691
      %2284 = vmatmul.mubr.bf16.gmra.mxu0 %v690
      %v2285 = vpop.f32.mrf.mxu0
      %v2286 = vadd.f32 %v505, %v2285
      %v2287 = vpop.f32.mrf.mxu0
      %v2288 = vadd.f32 %v509, %v2287
      %v2289 = vpop.f32.mrf.mxu0
      %v2290 = vadd.f32 %v505, %v2289
      %v2291 = vpop.f32.mrf.mxu0
      %v2292 = vadd.f32 %v509, %v2291
      %2293 = vmatprep.mubr.bf16.mxu0 %v698
      %2294 = vmatmul.mubr.bf16.gmra.mxu0 %v697
      %v2295 = vpop.f32.mrf.mxu0
      %v2296 = vadd.f32 %v505, %v2295
      %v2297 = vpop.f32.mrf.mxu0
      %v2298 = vadd.f32 %v509, %v2297
      %v2299 = vpop.f32.mrf.mxu0
      %v2300 = vadd.f32 %v505, %v2299
      %v2301 = vpop.f32.mrf.mxu0
      %v2302 = vadd.f32 %v509, %v2301
      %2303 = vmatprep.mubr.bf16.mxu0 %v705
      %2304 = vmatmul.mubr.bf16.gmra.mxu0 %v704
      %v2305 = vpop.f32.mrf.mxu0
      %v2306 = vadd.f32 %v505, %v2305
      %v2307 = vpop.f32.mrf.mxu0
      %v2308 = vadd.f32 %v509, %v2307
      %v2309 = vpop.f32.mrf.mxu0
      %v2310 = vadd.f32 %v505, %v2309
      %v2311 = vpop.f32.mrf.mxu0
      %v2312 = vadd.f32 %v509, %v2311
      %2313 = vmatprep.mubr.bf16.mxu0 %v712
      %2314 = vmatmul.mubr.bf16.gmra.mxu0 %v711
      %v2315 = vpop.f32.mrf.mxu0
      %v2316 = vadd.f32 %v505, %v2315
      %v2317 = vpop.f32.mrf.mxu0
      %v2318 = vadd.f32 %v509, %v2317
      %v2319 = vpop.f32.mrf.mxu0
      %v2320 = vadd.f32 %v505, %v2319
      %v2321 = vpop.f32.mrf.mxu0
      %v2322 = vadd.f32 %v509, %v2321
      %2323 = vmatprep.mubr.bf16.mxu0 %v719
      %2324 = vmatmul.mubr.bf16.gmra.mxu0 %v718
      %v2325 = vpop.f32.mrf.mxu0
      %v2326 = vadd.f32 %v505, %v2325
      %v2327 = vpop.f32.mrf.mxu0
      %v2328 = vadd.f32 %v509, %v2327
      %v2329 = vpop.f32.mrf.mxu0
      %v2330 = vadd.f32 %v505, %v2329
      %v2331 = vpop.f32.mrf.mxu0
      %v2332 = vadd.f32 %v509, %v2331
      %2333 = vmatprep.mubr.bf16.mxu0 %v726
      %2334 = vmatmul.mubr.bf16.gmra.mxu0 %v725
      %v2335 = vpop.f32.mrf.mxu0
      %v2336 = vadd.f32 %v505, %v2335
      %v2337 = vpop.f32.mrf.mxu0
      %v2338 = vadd.f32 %v509, %v2337
      %v2339 = vpop.f32.mrf.mxu0
      %v2340 = vadd.f32 %v505, %v2339
      %v2341 = vpop.f32.mrf.mxu0
      %v2342 = vadd.f32 %v509, %v2341
      %2343 = vmatprep.mubr.bf16.mxu0 %v733
      %2344 = vmatmul.mubr.bf16.gmra.mxu0 %v732
      %v2345 = vpop.f32.mrf.mxu0
      %v2346 = vadd.f32 %v505, %v2345
      %v2347 = vpop.f32.mrf.mxu0
      %v2348 = vadd.f32 %v509, %v2347
      %v2349 = vpop.f32.mrf.mxu0
      %v2350 = vadd.f32 %v505, %v2349
      %v2351 = vpop.f32.mrf.mxu0
      %v2352 = vadd.f32 %v509, %v2351
      %2353 = vmatprep.mubr.bf16.mxu0 %v740
      %2354 = vmatmul.mubr.bf16.gmra.mxu0 %v739
      %v2355 = vpop.f32.mrf.mxu0
      %v2356 = vadd.f32 %v505, %v2355
      %v2357 = vpop.f32.mrf.mxu0
      %v2358 = vadd.f32 %v509, %v2357
      %v2359 = vpop.f32.mrf.mxu0
      %v2360 = vadd.f32 %v505, %v2359
      %v2361 = vpop.f32.mrf.mxu0
      %v2362 = vadd.f32 %v509, %v2361
      %2363 = vdwg.mxu0
      %2364 = vmatprep.subr.bf16.mxu0 %v1477
      %2365 = vmatpush1.bf16.msra.mxu0 %v1476
      %2366 = vmatprep.subr.bf16.mxu0 %v1473
      %2367 = vmatpush1.bf16.msra.mxu0 %v1472
      %2368 = vmatprep.subr.bf16.mxu0 %v1469
      %2369 = vmatpush1.bf16.msra.mxu0 %v1468
      %2370 = vmatprep.subr.bf16.mxu0 %v1465
      %2371 = vmatpush1.bf16.msra.mxu0 %v1464
      %2372 = vmatprep.subr.bf16.mxu0 %v1461
      %2373 = vmatpush1.bf16.msra.mxu0 %v1460
      %2374 = vmatprep.subr.bf16.mxu0 %v1457
      %2375 = vmatpush1.bf16.msra.mxu0 %v1456
      %2376 = vmatprep.subr.bf16.mxu0 %v1453
      %2377 = vmatpush1.bf16.msra.mxu0 %v1452
      %2378 = vmatprep.subr.bf16.mxu0 %v1449
      %2379 = vmatpush1.bf16.msra.mxu0 %v1448
      %2380 = vmatprep.subr.bf16.mxu0 %v1509
      %2381 = vmatpush2.bf16.msra.mxu0 %v1508
      %2382 = vmatprep.subr.bf16.mxu0 %v1505
      %2383 = vmatpush2.bf16.msra.mxu0 %v1504
      %2384 = vmatprep.subr.bf16.mxu0 %v1501
      %2385 = vmatpush2.bf16.msra.mxu0 %v1500
      %2386 = vmatprep.subr.bf16.mxu0 %v1497
      %2387 = vmatpush2.bf16.msra.mxu0 %v1496
      %2388 = vmatprep.subr.bf16.mxu0 %v1493
      %2389 = vmatpush2.bf16.msra.mxu0 %v1492
      %2390 = vmatprep.subr.bf16.mxu0 %v1489
      %2391 = vmatpush2.bf16.msra.mxu0 %v1488
      %2392 = vmatprep.subr.bf16.mxu0 %v1485
      %2393 = vmatpush2.bf16.msra.mxu0 %v1484
      %2394 = vmatprep.subr.bf16.mxu0 %v1481
      %2395 = vmatpush2.bf16.msra.mxu0 %v1480
      %2396 = vmatprep.mubr.bf16.mxu0 %v693
      %2397 = vmatmul.mubr.bf16.gmra.mxu0 %v692
      %v2398 = vpop.f32.mrf.mxu0
      %v2399 = vadd.f32 %v2286, %v2398
      %v2400 = vpop.f32.mrf.mxu0
      %v2401 = vadd.f32 %v2288, %v2400
      %v2402 = vpop.f32.mrf.mxu0
      %v2403 = vadd.f32 %v2290, %v2402
      %v2404 = vpop.f32.mrf.mxu0
      %v2405 = vadd.f32 %v2292, %v2404
      %2406 = vmatprep.mubr.bf16.mxu0 %v700
      %2407 = vmatmul.mubr.bf16.gmra.mxu0 %v699
      %v2408 = vpop.f32.mrf.mxu0
      %v2409 = vadd.f32 %v2296, %v2408
      %v2410 = vpop.f32.mrf.mxu0
      %v2411 = vadd.f32 %v2298, %v2410
      %v2412 = vpop.f32.mrf.mxu0
      %v2413 = vadd.f32 %v2300, %v2412
      %v2414 = vpop.f32.mrf.mxu0
      %v2415 = vadd.f32 %v2302, %v2414
      %2416 = vmatprep.mubr.bf16.mxu0 %v707
      %2417 = vmatmul.mubr.bf16.gmra.mxu0 %v706
      %v2418 = vpop.f32.mrf.mxu0
      %v2419 = vadd.f32 %v2306, %v2418
      %v2420 = vpop.f32.mrf.mxu0
      %v2421 = vadd.f32 %v2308, %v2420
      %v2422 = vpop.f32.mrf.mxu0
      %v2423 = vadd.f32 %v2310, %v2422
      %v2424 = vpop.f32.mrf.mxu0
      %v2425 = vadd.f32 %v2312, %v2424
      %2426 = vmatprep.mubr.bf16.mxu0 %v714
      %2427 = vmatmul.mubr.bf16.gmra.mxu0 %v713
      %v2428 = vpop.f32.mrf.mxu0
      %v2429 = vadd.f32 %v2316, %v2428
      %v2430 = vpop.f32.mrf.mxu0
      %v2431 = vadd.f32 %v2318, %v2430
      %v2432 = vpop.f32.mrf.mxu0
      %v2433 = vadd.f32 %v2320, %v2432
      %v2434 = vpop.f32.mrf.mxu0
      %v2435 = vadd.f32 %v2322, %v2434
      %2436 = vmatprep.mubr.bf16.mxu0 %v721
      %2437 = vmatmul.mubr.bf16.gmra.mxu0 %v720
      %v2438 = vpop.f32.mrf.mxu0
      %v2439 = vadd.f32 %v2326, %v2438
      %v2440 = vpop.f32.mrf.mxu0
      %v2441 = vadd.f32 %v2328, %v2440
      %v2442 = vpop.f32.mrf.mxu0
      %v2443 = vadd.f32 %v2330, %v2442
      %v2444 = vpop.f32.mrf.mxu0
      %v2445 = vadd.f32 %v2332, %v2444
      %2446 = vmatprep.mubr.bf16.mxu0 %v728
      %2447 = vmatmul.mubr.bf16.gmra.mxu0 %v727
      %v2448 = vpop.f32.mrf.mxu0
      %v2449 = vadd.f32 %v2336, %v2448
      %v2450 = vpop.f32.mrf.mxu0
      %v2451 = vadd.f32 %v2338, %v2450
      %v2452 = vpop.f32.mrf.mxu0
      %v2453 = vadd.f32 %v2340, %v2452
      %v2454 = vpop.f32.mrf.mxu0
      %v2455 = vadd.f32 %v2342, %v2454
      %2456 = vmatprep.mubr.bf16.mxu0 %v735
      %2457 = vmatmul.mubr.bf16.gmra.mxu0 %v734
      %v2458 = vpop.f32.mrf.mxu0
      %v2459 = vadd.f32 %v2346, %v2458
      %v2460 = vpop.f32.mrf.mxu0
      %v2461 = vadd.f32 %v2348, %v2460
      %v2462 = vpop.f32.mrf.mxu0
      %v2463 = vadd.f32 %v2350, %v2462
      %v2464 = vpop.f32.mrf.mxu0
      %v2465 = vadd.f32 %v2352, %v2464
      %2466 = vmatprep.mubr.bf16.mxu0 %v742
      %2467 = vmatmul.mubr.bf16.gmra.mxu0 %v741
      %v2468 = vpop.f32.mrf.mxu0
      %v2469 = vadd.f32 %v2356, %v2468
      %v2470 = vpop.f32.mrf.mxu0
      %v2471 = vadd.f32 %v2358, %v2470
      %v2472 = vpop.f32.mrf.mxu0
      %v2473 = vadd.f32 %v2360, %v2472
      %v2474 = vpop.f32.mrf.mxu0
      %v2475 = vadd.f32 %v2362, %v2474
      %2476 = vdwg.mxu0
      %2477 = vmatprep.subr.bf16.mxu0 %v1541
      %2478 = vmatpush1.bf16.msra.mxu0 %v1540
      %2479 = vmatprep.subr.bf16.mxu0 %v1537
      %2480 = vmatpush1.bf16.msra.mxu0 %v1536
      %2481 = vmatprep.subr.bf16.mxu0 %v1533
      %2482 = vmatpush1.bf16.msra.mxu0 %v1532
      %2483 = vmatprep.subr.bf16.mxu0 %v1529
      %2484 = vmatpush1.bf16.msra.mxu0 %v1528
      %2485 = vmatprep.subr.bf16.mxu0 %v1525
      %2486 = vmatpush1.bf16.msra.mxu0 %v1524
      %2487 = vmatprep.subr.bf16.mxu0 %v1521
      %2488 = vmatpush1.bf16.msra.mxu0 %v1520
      %2489 = vmatprep.subr.bf16.mxu0 %v1517
      %2490 = vmatpush1.bf16.msra.mxu0 %v1516
      %2491 = vmatprep.subr.bf16.mxu0 %v1513
      %2492 = vmatpush1.bf16.msra.mxu0 %v1512
      %2493 = vmatprep.subr.bf16.mxu0 %v1573
      %2494 = vmatpush2.bf16.msra.mxu0 %v1572
      %2495 = vmatprep.subr.bf16.mxu0 %v1569
      %2496 = vmatpush2.bf16.msra.mxu0 %v1568
      %2497 = vmatprep.subr.bf16.mxu0 %v1565
      %2498 = vmatpush2.bf16.msra.mxu0 %v1564
      %2499 = vmatprep.subr.bf16.mxu0 %v1561
      %2500 = vmatpush2.bf16.msra.mxu0 %v1560
      %2501 = vmatprep.subr.bf16.mxu0 %v1557
      %2502 = vmatpush2.bf16.msra.mxu0 %v1556
      %2503 = vmatprep.subr.bf16.mxu0 %v1553
      %2504 = vmatpush2.bf16.msra.mxu0 %v1552
      %2505 = vmatprep.subr.bf16.mxu0 %v1549
      %2506 = vmatpush2.bf16.msra.mxu0 %v1548
      %2507 = vmatprep.subr.bf16.mxu0 %v1545
      %2508 = vmatpush2.bf16.msra.mxu0 %v1544
      %2509 = vmatprep.mubr.bf16.mxu0 %v695
      %2510 = vmatmul.mubr.bf16.gmra.mxu0 %v694
      %v2511 = vpop.f32.mrf.mxu0
      %v2512 = vadd.f32 %v2399, %v2511
      %v2513 = vpop.f32.mrf.mxu0
      %v2514 = vadd.f32 %v2401, %v2513
      %v2515 = vpop.f32.mrf.mxu0
      %v2516 = vadd.f32 %v2403, %v2515
      %v2517 = vpop.f32.mrf.mxu0
      %v2518 = vadd.f32 %v2405, %v2517
      %2519 = vmatprep.mubr.bf16.mxu0 %v702
      %2520 = vmatmul.mubr.bf16.gmra.mxu0 %v701
      %v2521 = vpop.f32.mrf.mxu0
      %v2522 = vadd.f32 %v2409, %v2521
      %v2523 = vpop.f32.mrf.mxu0
      %v2524 = vadd.f32 %v2411, %v2523
      %v2525 = vpop.f32.mrf.mxu0
      %v2526 = vadd.f32 %v2413, %v2525
      %v2527 = vpop.f32.mrf.mxu0
      %v2528 = vadd.f32 %v2415, %v2527
      %2529 = vmatprep.mubr.bf16.mxu0 %v709
      %2530 = vmatmul.mubr.bf16.gmra.mxu0 %v708
      %v2531 = vpop.f32.mrf.mxu0
      %v2532 = vadd.f32 %v2419, %v2531
      %v2533 = vpop.f32.mrf.mxu0
      %v2534 = vadd.f32 %v2421, %v2533
      %v2535 = vpop.f32.mrf.mxu0
      %v2536 = vadd.f32 %v2423, %v2535
      %v2537 = vpop.f32.mrf.mxu0
      %v2538 = vadd.f32 %v2425, %v2537
      %2539 = vmatprep.mubr.bf16.mxu0 %v716
      %2540 = vmatmul.mubr.bf16.gmra.mxu0 %v715
      %v2541 = vpop.f32.mrf.mxu0
      %v2542 = vadd.f32 %v2429, %v2541
      %v2543 = vpop.f32.mrf.mxu0
      %v2544 = vadd.f32 %v2431, %v2543
      %v2545 = vpop.f32.mrf.mxu0
      %v2546 = vadd.f32 %v2433, %v2545
      %v2547 = vpop.f32.mrf.mxu0
      %v2548 = vadd.f32 %v2435, %v2547
      %2549 = vmatprep.mubr.bf16.mxu0 %v723
      %2550 = vmatmul.mubr.bf16.gmra.mxu0 %v722
      %v2551 = vpop.f32.mrf.mxu0
      %v2552 = vadd.f32 %v2439, %v2551
      %v2553 = vpop.f32.mrf.mxu0
      %v2554 = vadd.f32 %v2441, %v2553
      %v2555 = vpop.f32.mrf.mxu0
      %v2556 = vadd.f32 %v2443, %v2555
      %v2557 = vpop.f32.mrf.mxu0
      %v2558 = vadd.f32 %v2445, %v2557
      %2559 = vmatprep.mubr.bf16.mxu0 %v730
      %2560 = vmatmul.mubr.bf16.gmra.mxu0 %v729
      %v2561 = vpop.f32.mrf.mxu0
      %v2562 = vadd.f32 %v2449, %v2561
      %v2563 = vpop.f32.mrf.mxu0
      %v2564 = vadd.f32 %v2451, %v2563
      %v2565 = vpop.f32.mrf.mxu0
      %v2566 = vadd.f32 %v2453, %v2565
      %v2567 = vpop.f32.mrf.mxu0
      %v2568 = vadd.f32 %v2455, %v2567
      %2569 = vmatprep.mubr.bf16.mxu0 %v737
      %2570 = vmatmul.mubr.bf16.gmra.mxu0 %v736
      %v2571 = vpop.f32.mrf.mxu0
      %v2572 = vadd.f32 %v2459, %v2571
      %v2573 = vpop.f32.mrf.mxu0
      %v2574 = vadd.f32 %v2461, %v2573
      %v2575 = vpop.f32.mrf.mxu0
      %v2576 = vadd.f32 %v2463, %v2575
      %v2577 = vpop.f32.mrf.mxu0
      %v2578 = vadd.f32 %v2465, %v2577
      %2579 = vmatprep.mubr.bf16.mxu0 %v744
      %2580 = vmatmul.mubr.bf16.gmra.mxu0 %v743
      %v2581 = vpop.f32.mrf.mxu0
      %v2582 = vadd.f32 %v2469, %v2581
      %v2583 = vpop.f32.mrf.mxu0
      %v2584 = vadd.f32 %v2471, %v2583
      %v2585 = vpop.f32.mrf.mxu0
      %v2586 = vadd.f32 %v2473, %v2585
      %v2587 = vpop.f32.mrf.mxu0
      %v2588 = vadd.f32 %v2475, %v2587
      %2589 = vdwg.mxu0
      %2590 = vmatprep.subr.bf16.mxu0 0
      %2591 = vmatpush1.bf16.msra.mxu0 0
      %2592 = vmatprep.subr.bf16.mxu0 0
      %2593 = vmatpush1.bf16.msra.mxu0 0
      %2594 = vmatprep.subr.bf16.mxu0 0
      %2595 = vmatpush1.bf16.msra.mxu0 0
      %2596 = vmatprep.subr.bf16.mxu0 0
      %2597 = vmatpush1.bf16.msra.mxu0 0
      %2598 = vmatprep.subr.bf16.mxu0 0
      %2599 = vmatpush1.bf16.msra.mxu0 0
      %2600 = vmatprep.subr.bf16.mxu0 0
      %2601 = vmatpush1.bf16.msra.mxu0 0
      %2602 = vmatprep.subr.bf16.mxu0 0
      %2603 = vmatpush1.bf16.msra.mxu0 0
      %2604 = vmatprep.subr.bf16.mxu0 %v1577
      %2605 = vmatpush1.bf16.msra.mxu0 %v1576
      %2606 = vmatprep.subr.bf16.mxu0 0
      %2607 = vmatpush2.bf16.msra.mxu0 0
      %2608 = vmatprep.subr.bf16.mxu0 0
      %2609 = vmatpush2.bf16.msra.mxu0 0
      %2610 = vmatprep.subr.bf16.mxu0 0
      %2611 = vmatpush2.bf16.msra.mxu0 0
      %2612 = vmatprep.subr.bf16.mxu0 0
      %2613 = vmatpush2.bf16.msra.mxu0 0
      %2614 = vmatprep.subr.bf16.mxu0 0
      %2615 = vmatpush2.bf16.msra.mxu0 0
      %2616 = vmatprep.subr.bf16.mxu0 0
      %2617 = vmatpush2.bf16.msra.mxu0 0
      %2618 = vmatprep.subr.bf16.mxu0 0
      %2619 = vmatpush2.bf16.msra.mxu0 0
      %2620 = vmatprep.subr.bf16.mxu0 0
      %2621 = vmatpush2.bf16.msra.mxu0 0
      %2622 = vmatprep.mubr.bf16.mxu0 0
      %2623 = vmatmul.mubr.bf16.gmra.mxu0 %v1776
      %v2624 = vpop.f32.mrf.mxu0
      %v2625 = vadd.f32 %v2512, %v2624
      %v2626 = vpop.f32.mrf.mxu0
      %v2627 = vadd.f32 %v2514, %v2626
      %v2628 = vpop.f32.mrf.mxu0
      %v2629 = vadd.f32 %v2516, %v2628
      %v2630 = vpop.f32.mrf.mxu0
      %v2631 = vadd.f32 %v2518, %v2630
      %2632 = vmatprep.mubr.bf16.mxu0 0
      %2633 = vmatmul.mubr.bf16.gmra.mxu0 %v1779
      %v2634 = vpop.f32.mrf.mxu0
      %v2635 = vadd.f32 %v2522, %v2634
      %v2636 = vpop.f32.mrf.mxu0
      %v2637 = vadd.f32 %v2524, %v2636
      %v2638 = vpop.f32.mrf.mxu0
      %v2639 = vadd.f32 %v2526, %v2638
      %v2640 = vpop.f32.mrf.mxu0
      %v2641 = vadd.f32 %v2528, %v2640
      %2642 = vmatprep.mubr.bf16.mxu0 0
      %2643 = vmatmul.mubr.bf16.gmra.mxu0 %v1782
      %v2644 = vpop.f32.mrf.mxu0
      %v2645 = vadd.f32 %v2532, %v2644
      %v2646 = vpop.f32.mrf.mxu0
      %v2647 = vadd.f32 %v2534, %v2646
      %v2648 = vpop.f32.mrf.mxu0
      %v2649 = vadd.f32 %v2536, %v2648
      %v2650 = vpop.f32.mrf.mxu0
      %v2651 = vadd.f32 %v2538, %v2650
      %2652 = vmatprep.mubr.bf16.mxu0 0
      %2653 = vmatmul.mubr.bf16.gmra.mxu0 %v1785
      %v2654 = vpop.f32.mrf.mxu0
      %v2655 = vadd.f32 %v2542, %v2654
      %v2656 = vpop.f32.mrf.mxu0
      %v2657 = vadd.f32 %v2544, %v2656
      %v2658 = vpop.f32.mrf.mxu0
      %v2659 = vadd.f32 %v2546, %v2658
      %v2660 = vpop.f32.mrf.mxu0
      %v2661 = vadd.f32 %v2548, %v2660
      %2662 = vmatprep.mubr.bf16.mxu0 0
      %2663 = vmatmul.mubr.bf16.gmra.mxu0 %v1788
      %v2664 = vpop.f32.mrf.mxu0
      %v2665 = vadd.f32 %v2552, %v2664
      %v2666 = vpop.f32.mrf.mxu0
      %v2667 = vadd.f32 %v2554, %v2666
      %v2668 = vpop.f32.mrf.mxu0
      %v2669 = vadd.f32 %v2556, %v2668
      %v2670 = vpop.f32.mrf.mxu0
      %v2671 = vadd.f32 %v2558, %v2670
      %2672 = vmatprep.mubr.bf16.mxu0 0
      %2673 = vmatmul.mubr.bf16.gmra.mxu0 %v1791
      %v2674 = vpop.f32.mrf.mxu0
      %v2675 = vadd.f32 %v2562, %v2674
      %v2676 = vpop.f32.mrf.mxu0
      %v2677 = vadd.f32 %v2564, %v2676
      %v2678 = vpop.f32.mrf.mxu0
      %v2679 = vadd.f32 %v2566, %v2678
      %v2680 = vpop.f32.mrf.mxu0
      %v2681 = vadd.f32 %v2568, %v2680
      %2682 = vmatprep.mubr.bf16.mxu0 0
      %2683 = vmatmul.mubr.bf16.gmra.mxu0 %v1794
      %v2684 = vpop.f32.mrf.mxu0
      %v2685 = vadd.f32 %v2572, %v2684
      %v2686 = vpop.f32.mrf.mxu0
      %v2687 = vadd.f32 %v2574, %v2686
      %v2688 = vpop.f32.mrf.mxu0
      %v2689 = vadd.f32 %v2576, %v2688
      %v2690 = vpop.f32.mrf.mxu0
      %v2691 = vadd.f32 %v2578, %v2690
      %2692 = vmatprep.mubr.bf16.mxu0 0
      %2693 = vmatmul.mubr.bf16.gmra.mxu0 %v1797
      %v2694 = vpop.f32.mrf.mxu0
      %v2695 = vadd.f32 %v2582, %v2694
      %v2696 = vpop.f32.mrf.mxu0
      %v2697 = vadd.f32 %v2584, %v2696
      %v2698 = vpop.f32.mrf.mxu0
      %v2699 = vadd.f32 %v2586, %v2698
      %v2700 = vpop.f32.mrf.mxu0
      %v2701 = vadd.f32 %v2588, %v2700
      %2702 = vdwg.mxu0
      %v2703 = vmax.f32 %v2173, 0.0
      %v2704 = vmax.f32 %v2175, 0.0
      %v2705 = vmax.f32 %v2625, 0.0
      %v2706 = vmax.f32 %v2627, 0.0
      %v2707 = vmax.f32 %v2177, 0.0
      %v2708 = vmax.f32 %v2179, 0.0
      %v2709 = vmax.f32 %v2629, 0.0
      %v2710 = vmax.f32 %v2631, 0.0
      %v2711 = vmax.f32 %v2183, 0.0
      %v2712 = vmax.f32 %v2185, 0.0
      %v2713 = vmax.f32 %v2635, 0.0
      %v2714 = vmax.f32 %v2637, 0.0
      %v2715 = vmax.f32 %v2187, 0.0
      %v2716 = vmax.f32 %v2189, 0.0
      %v2717 = vmax.f32 %v2639, 0.0
      %v2718 = vmax.f32 %v2641, 0.0
      %v2719 = vmax.f32 %v2193, 0.0
      %v2720 = vmax.f32 %v2195, 0.0
      %v2721 = vmax.f32 %v2645, 0.0
      %v2722 = vmax.f32 %v2647, 0.0
      %v2723 = vmax.f32 %v2197, 0.0
      %v2724 = vmax.f32 %v2199, 0.0
      %v2725 = vmax.f32 %v2649, 0.0
      %v2726 = vmax.f32 %v2651, 0.0
      %v2727 = vmax.f32 %v2203, 0.0
      %v2728 = vmax.f32 %v2205, 0.0
      %v2729 = vmax.f32 %v2655, 0.0
      %v2730 = vmax.f32 %v2657, 0.0
      %v2731 = vmax.f32 %v2207, 0.0
      %v2732 = vmax.f32 %v2209, 0.0
      %v2733 = vmax.f32 %v2659, 0.0
      %v2734 = vmax.f32 %v2661, 0.0
      %v2735 = vmax.f32 %v2213, 0.0
      %v2736 = vmax.f32 %v2215, 0.0
      %v2737 = vmax.f32 %v2665, 0.0
      %v2738 = vmax.f32 %v2667, 0.0
      %v2739 = vmax.f32 %v2217, 0.0
      %v2740 = vmax.f32 %v2219, 0.0
      %v2741 = vmax.f32 %v2669, 0.0
      %v2742 = vmax.f32 %v2671, 0.0
      %v2743 = vmax.f32 %v2223, 0.0
      %v2744 = vmax.f32 %v2225, 0.0
      %v2745 = vmax.f32 %v2675, 0.0
      %v2746 = vmax.f32 %v2677, 0.0
      %v2747 = vmax.f32 %v2227, 0.0
      %v2748 = vmax.f32 %v2229, 0.0
      %v2749 = vmax.f32 %v2679, 0.0
      %v2750 = vmax.f32 %v2681, 0.0
      %v2751 = vmax.f32 %v2233, 0.0
      %v2752 = vmax.f32 %v2235, 0.0
      %v2753 = vmax.f32 %v2685, 0.0
      %v2754 = vmax.f32 %v2687, 0.0
      %v2755 = vmax.f32 %v2237, 0.0
      %v2756 = vmax.f32 %v2239, 0.0
      %v2757 = vmax.f32 %v2689, 0.0
      %v2758 = vmax.f32 %v2691, 0.0
      %v2759 = vmax.f32 %v2243, 0.0
      %v2760 = vmax.f32 %v2245, 0.0
      %v2761 = vmax.f32 %v2695, 0.0
      %v2762 = vmax.f32 %v2697, 0.0
      %v2763 = vmax.f32 %v2247, 0.0
      %v2764 = vmax.f32 %v2249, 0.0
      %v2765 = vmax.f32 %v2699, 0.0
      %v2766 = vmax.f32 %v2701, 0.0
      %v2767 = vpack.c.bf16 %v2707, %v2703
      %v2768 = vpack.c.bf16 %v2708, %v2704
      %v2769 = vpack.c.bf16 %v2709, %v2705
      %v2770 = vpack.c.bf16 %v2710, %v2706
      %v2771 = vpack.c.bf16 %v2715, %v2711
      %v2772 = vpack.c.bf16 %v2716, %v2712
      %v2773 = vpack.c.bf16 %v2717, %v2713
      %v2774 = vpack.c.bf16 %v2718, %v2714
      %v2775 = vpack.c.bf16 %v2723, %v2719
      %v2776 = vpack.c.bf16 %v2724, %v2720
      %v2777 = vpack.c.bf16 %v2725, %v2721
      %v2778 = vpack.c.bf16 %v2726, %v2722
      %v2779 = vpack.c.bf16 %v2731, %v2727
      %v2780 = vpack.c.bf16 %v2732, %v2728
      %v2781 = vpack.c.bf16 %v2733, %v2729
      %v2782 = vpack.c.bf16 %v2734, %v2730
      %v2783 = vpack.c.bf16 %v2739, %v2735
      %v2784 = vpack.c.bf16 %v2740, %v2736
      %v2785 = vpack.c.bf16 %v2741, %v2737
      %v2786 = vpack.c.bf16 %v2742, %v2738
      %v2787 = vpack.c.bf16 %v2747, %v2743
      %v2788 = vpack.c.bf16 %v2748, %v2744
      %v2789 = vpack.c.bf16 %v2749, %v2745
      %v2790 = vpack.c.bf16 %v2750, %v2746
      %v2791 = vpack.c.bf16 %v2755, %v2751
      %v2792 = vpack.c.bf16 %v2756, %v2752
      %v2793 = vpack.c.bf16 %v2757, %v2753
      %v2794 = vpack.c.bf16 %v2758, %v2754
      %v2795 = vpack.c.bf16 %v2763, %v2759
      %v2796 = vpack.c.bf16 %v2764, %v2760
      %v2797 = vpack.c.bf16 %v2765, %v2761
      %v2798 = vpack.c.bf16 %v2766, %v2762
      %v2799 = vld [vmem:[%s3] sm:$0xf]
      %v2800 = vld [vmem:[%s3 + $0x4] sm:$0xf]
      %v2801 = vld [vmem:[%s3 + $0x8] sm:$0xf]
      %v2802 = vld [vmem:[%s3 + $0xc] sm:$0xf]
      %v2803 = vld [vmem:[%s3 + $0x10] sm:$0xf]
      %v2804 = vld [vmem:[%s3 + $0x14] sm:$0xf]
      %v2805 = vld [vmem:[%s3 + $0x18] sm:$0xf]
      %v2806 = vld [vmem:[%s3 + $0x1c] sm:$0xf]
      %v2807 = vld [vmem:[%s3 + $0x20] sm:$0xf]
      %v2808 = vld [vmem:[%s3 + $0x24] sm:$0xf]
      %v2809 = vld [vmem:[%s3 + $0x28] sm:$0xf]
      %v2810 = vld [vmem:[%s3 + $0x2c] sm:$0xf]
      %v2811 = vld [vmem:[%s3 + $0x30] sm:$0xf]
      %v2812 = vld [vmem:[%s3 + $0x34] sm:$0xf]
      %v2813 = vld [vmem:[%s3 + $0x38] sm:$0xf]
      %v2814 = vld [vmem:[%s3 + $0x3c] sm:$0xf]
      %v2815 = vld [vmem:[%s3 + $0x40] sm:$0xf]
      %v2816 = vld [vmem:[%s3 + $0x44] sm:$0xf]
      %v2817 = vld [vmem:[%s3 + $0x48] sm:$0xf]
      %v2818 = vld [vmem:[%s3 + $0x4c] sm:$0xf]
      %v2819 = vld [vmem:[%s3 + $0x50] sm:$0xf]
      %v2820 = vld [vmem:[%s3 + $0x54] sm:$0xf]
      %v2821 = vld [vmem:[%s3 + $0x58] sm:$0xf]
      %v2822 = vld [vmem:[%s3 + $0x5c] sm:$0xf]
      %v2823 = vld [vmem:[%s3 + $0x60] sm:$0xf]
      %v2824 = vld [vmem:[%s3 + $0x64] sm:$0xf]
      %v2825 = vld [vmem:[%s3 + $0x68] sm:$0xf]
      %v2826 = vld [vmem:[%s3 + $0x6c] sm:$0xf]
      %v2827 = vld [vmem:[%s3 + $0x70] sm:$0xf]
      %v2828 = vld [vmem:[%s3 + $0x74] sm:$0xf]
      %v2829 = vld [vmem:[%s3 + $0x78] sm:$0xf]
      %v2830 = vld [vmem:[%s3 + $0x7c] sm:$0xf]
      %v2831 = vld [vmem:[%s3 + $0x80] sm:$0xf]
      %v2832 = vld [vmem:[%s3 + $0x84] sm:$0xf]
      %v2833 = vld [vmem:[%s3 + $0x88] sm:$0xf]
      %v2834 = vld [vmem:[%s3 + $0x8c] sm:$0xf]
      %v2835 = vld [vmem:[%s3 + $0x90] sm:$0xf]
      %v2836 = vld [vmem:[%s3 + $0x94] sm:$0xf]
      %v2837 = vld [vmem:[%s3 + $0x98] sm:$0xf]
      %v2838 = vld [vmem:[%s3 + $0x9c] sm:$0xf]
      %v2839 = vld [vmem:[%s3 + $0xa0] sm:$0xf]
      %v2840 = vld [vmem:[%s3 + $0xa4] sm:$0xf]
      %v2841 = vld [vmem:[%s3 + $0xa8] sm:$0xf]
      %v2842 = vld [vmem:[%s3 + $0xac] sm:$0xf]
      %v2843 = vld [vmem:[%s3 + $0xb0] sm:$0xf]
      %v2844 = vld [vmem:[%s3 + $0xb4] sm:$0xf]
      %v2845 = vld [vmem:[%s3 + $0xb8] sm:$0xf]
      %v2846 = vld [vmem:[%s3 + $0xbc] sm:$0xf]
      %v2847 = vld [vmem:[%s3 + $0xc0] sm:$0xf]
      %v2848 = vld [vmem:[%s3 + $0xc4] sm:$0xf]
      %v2849 = vld [vmem:[%s3 + $0xc8] sm:$0xf]
      %v2850 = vld [vmem:[%s3 + $0xcc] sm:$0xf]
      %v2851 = vld [vmem:[%s3 + $0xd0] sm:$0xf]
      %v2852 = vld [vmem:[%s3 + $0xd4] sm:$0xf]
      %v2853 = vld [vmem:[%s3 + $0xd8] sm:$0xf]
      %v2854 = vld [vmem:[%s3 + $0xdc] sm:$0xf]
      %v2855 = vld [vmem:[%s3 + $0xe0] sm:$0xf]
      %v2856 = vld [vmem:[%s3 + $0xe4] sm:$0xf]
      %v2857 = vld [vmem:[%s3 + $0xe8] sm:$0xf]
      %v2858 = vld [vmem:[%s3 + $0xec] sm:$0xf]
      %v2859 = vld [vmem:[%s3 + $0xf0] sm:$0xf]
      %v2860 = vld [vmem:[%s3 + $0xf4] sm:$0xf]
      %v2861 = vld [vmem:[%s3 + $0xf8] sm:$0xf]
      %v2862 = vld [vmem:[%s3 + $0xfc] sm:$0xf]
      %v2863 = vld [vmem:[%s4] sm:$0x1]
      %v2865 = vlaneseq
      %v2866 = vshrl.u32 %v2865, 7
      %v2867 = vsub.s32 0, %v2866
      %v2868 = vrot.slane %v2863, %v2867
      %v2934 = vunpack.c.l.b16 %v2799
      %v2935 = vunpack.c.l.b16 %v2800
      %v2936 = vunpack.c.l.b16 %v2801
      %v2937 = vunpack.c.l.b16 %v2802
      %v2938 = vunpack.c.l.b16 %v2803
      %v2939 = vunpack.c.l.b16 %v2804
      %v2940 = vunpack.c.l.b16 %v2805
      %v2941 = vunpack.c.l.b16 %v2806
      %v2942 = vunpack.c.l.b16 %v2807
      %v2943 = vunpack.c.l.b16 %v2808
      %v2944 = vunpack.c.l.b16 %v2809
      %v2945 = vunpack.c.l.b16 %v2810
      %v2946 = vunpack.c.l.b16 %v2811
      %v2947 = vunpack.c.l.b16 %v2812
      %v2948 = vunpack.c.l.b16 %v2813
      %v2949 = vunpack.c.l.b16 %v2814
      %v2950 = vunpack.c.l.b16 %v2815
      %v2951 = vunpack.c.l.b16 %v2816
      %v2952 = vunpack.c.l.b16 %v2817
      %v2953 = vunpack.c.l.b16 %v2818
      %v2954 = vunpack.c.l.b16 %v2819
      %v2955 = vunpack.c.l.b16 %v2820
      %v2956 = vunpack.c.l.b16 %v2821
      %v2957 = vunpack.c.l.b16 %v2822
      %v2958 = vunpack.c.l.b16 %v2823
      %v2959 = vunpack.c.l.b16 %v2824
      %v2960 = vunpack.c.l.b16 %v2825
      %v2961 = vunpack.c.l.b16 %v2826
      %v2962 = vunpack.c.l.b16 %v2827
      %v2963 = vunpack.c.l.b16 %v2828
      %v2964 = vunpack.c.l.b16 %v2829
      %v2965 = vunpack.c.l.b16 %v2830
      %v2966 = vunpack.c.l.b16 %v2831
      %v2967 = vunpack.c.l.b16 %v2832
      %v2968 = vunpack.c.l.b16 %v2833
      %v2969 = vunpack.c.l.b16 %v2834
      %v2970 = vunpack.c.l.b16 %v2835
      %v2971 = vunpack.c.l.b16 %v2836
      %v2972 = vunpack.c.l.b16 %v2837
      %v2973 = vunpack.c.l.b16 %v2838
      %v2974 = vunpack.c.l.b16 %v2839
      %v2975 = vunpack.c.l.b16 %v2840
      %v2976 = vunpack.c.l.b16 %v2841
      %v2977 = vunpack.c.l.b16 %v2842
      %v2978 = vunpack.c.l.b16 %v2843
      %v2979 = vunpack.c.l.b16 %v2844
      %v2980 = vunpack.c.l.b16 %v2845
      %v2981 = vunpack.c.l.b16 %v2846
      %v2982 = vunpack.c.l.b16 %v2847
      %v2983 = vunpack.c.l.b16 %v2848
      %v2984 = vunpack.c.l.b16 %v2849
      %v2985 = vunpack.c.l.b16 %v2850
      %v2986 = vunpack.c.l.b16 %v2851
      %v2987 = vunpack.c.l.b16 %v2852
      %v2988 = vunpack.c.l.b16 %v2853
      %v2989 = vunpack.c.l.b16 %v2854
      %v2990 = vunpack.c.l.b16 %v2855
      %v2991 = vunpack.c.l.b16 %v2856
      %v2992 = vunpack.c.l.b16 %v2857
      %v2993 = vunpack.c.l.b16 %v2858
      %v2994 = vunpack.c.l.b16 %v2859
      %v2995 = vunpack.c.l.b16 %v2860
      %v2996 = vunpack.c.l.b16 %v2861
      %v2997 = vunpack.c.l.b16 %v2862
      %v2998 = vpack.c.b16 %v2935, %v2934
      %v2999 = vpack.c.b16 %v2937, %v2936
      %v3000 = vpack.c.b16 %v2939, %v2938
      %v3001 = vpack.c.b16 %v2941, %v2940
      %v3002 = vpack.c.b16 %v2943, %v2942
      %v3003 = vpack.c.b16 %v2945, %v2944
      %v3004 = vpack.c.b16 %v2947, %v2946
      %v3005 = vpack.c.b16 %v2949, %v2948
      %v3006 = vpack.c.b16 %v2951, %v2950
      %v3007 = vpack.c.b16 %v2953, %v2952
      %v3008 = vpack.c.b16 %v2955, %v2954
      %v3009 = vpack.c.b16 %v2957, %v2956
      %v3010 = vpack.c.b16 %v2959, %v2958
      %v3011 = vpack.c.b16 %v2961, %v2960
      %v3012 = vpack.c.b16 %v2963, %v2962
      %v3013 = vpack.c.b16 %v2965, %v2964
      %v3014 = vpack.c.b16 %v2967, %v2966
      %v3015 = vpack.c.b16 %v2969, %v2968
      %v3016 = vpack.c.b16 %v2971, %v2970
      %v3017 = vpack.c.b16 %v2973, %v2972
      %v3018 = vpack.c.b16 %v2975, %v2974
      %v3019 = vpack.c.b16 %v2977, %v2976
      %v3020 = vpack.c.b16 %v2979, %v2978
      %v3021 = vpack.c.b16 %v2981, %v2980
      %v3022 = vpack.c.b16 %v2983, %v2982
      %v3023 = vpack.c.b16 %v2985, %v2984
      %v3024 = vpack.c.b16 %v2987, %v2986
      %v3025 = vpack.c.b16 %v2989, %v2988
      %v3026 = vpack.c.b16 %v2991, %v2990
      %v3027 = vpack.c.b16 %v2993, %v2992
      %v3028 = vpack.c.b16 %v2995, %v2994
      %v3029 = vpack.c.b16 %v2997, %v2996
      %3062 = vmatprep.subr.bf16.mxu0 0
      %3063 = vmatpush1.bf16.msra.mxu0 %v3005
      %3064 = vmatprep.subr.bf16.mxu0 0
      %3065 = vmatpush1.bf16.msra.mxu0 %v3004
      %3066 = vmatprep.subr.bf16.mxu0 0
      %3067 = vmatpush1.bf16.msra.mxu0 %v3003
      %3068 = vmatprep.subr.bf16.mxu0 0
      %3069 = vmatpush1.bf16.msra.mxu0 %v3002
      %3070 = vmatprep.subr.bf16.mxu0 0
      %3071 = vmatpush1.bf16.msra.mxu0 %v3001
      %3072 = vmatprep.subr.bf16.mxu0 0
      %3073 = vmatpush1.bf16.msra.mxu0 %v3000
      %3074 = vmatprep.subr.bf16.mxu0 0
      %3075 = vmatpush1.bf16.msra.mxu0 %v2999
      %3076 = vmatprep.subr.bf16.mxu0 0
      %3077 = vmatpush1.bf16.msra.mxu0 %v2998
      %3078 = vmatprep.subr.bf16.mxu0 0
      %3079 = vmatpush2.bf16.msra.mxu0 %v3013
      %3080 = vmatprep.subr.bf16.mxu0 0
      %3081 = vmatpush2.bf16.msra.mxu0 %v3012
      %3082 = vmatprep.subr.bf16.mxu0 0
      %3083 = vmatpush2.bf16.msra.mxu0 %v3011
      %3084 = vmatprep.subr.bf16.mxu0 0
      %3085 = vmatpush2.bf16.msra.mxu0 %v3010
      %3086 = vmatprep.subr.bf16.mxu0 0
      %3087 = vmatpush2.bf16.msra.mxu0 %v3009
      %3088 = vmatprep.subr.bf16.mxu0 0
      %3089 = vmatpush2.bf16.msra.mxu0 %v3008
      %3090 = vmatprep.subr.bf16.mxu0 0
      %3091 = vmatpush2.bf16.msra.mxu0 %v3007
      %3092 = vmatprep.subr.bf16.mxu0 0
      %3093 = vmatpush2.bf16.msra.mxu0 %v3006
      %3094 = vmatprep.mubr.bf16.mxu0 %v2768
      %3095 = vmatmul.mubr.bf16.gmra.mxu0 %v2767
      %v3096 = vpop.f32.mrf.mxu0
      %v3097 = vadd.f32 %v2868, %v3096
      %v3098 = vpop.f32.mrf.mxu0
      %v3099 = vpop.f32.mrf.mxu0
      %v3100 = vadd.f32 %v2868, %v3099
      %v3101 = vpop.f32.mrf.mxu0
      %3102 = vmatprep.mubr.bf16.mxu0 %v2772
      %3103 = vmatmul.mubr.bf16.gmra.mxu0 %v2771
      %v3104 = vpop.f32.mrf.mxu0
      %v3105 = vadd.f32 %v2868, %v3104
      %v3106 = vpop.f32.mrf.mxu0
      %v3107 = vpop.f32.mrf.mxu0
      %v3108 = vadd.f32 %v2868, %v3107
      %v3109 = vpop.f32.mrf.mxu0
      %3110 = vmatprep.mubr.bf16.mxu0 %v2776
      %3111 = vmatmul.mubr.bf16.gmra.mxu0 %v2775
      %v3112 = vpop.f32.mrf.mxu0
      %v3113 = vadd.f32 %v2868, %v3112
      %v3114 = vpop.f32.mrf.mxu0
      %v3115 = vpop.f32.mrf.mxu0
      %v3116 = vadd.f32 %v2868, %v3115
      %v3117 = vpop.f32.mrf.mxu0
      %3118 = vmatprep.mubr.bf16.mxu0 %v2780
      %3119 = vmatmul.mubr.bf16.gmra.mxu0 %v2779
      %v3120 = vpop.f32.mrf.mxu0
      %v3121 = vadd.f32 %v2868, %v3120
      %v3122 = vpop.f32.mrf.mxu0
      %v3123 = vpop.f32.mrf.mxu0
      %v3124 = vadd.f32 %v2868, %v3123
      %v3125 = vpop.f32.mrf.mxu0
      %3126 = vmatprep.mubr.bf16.mxu0 %v2784
      %3127 = vmatmul.mubr.bf16.gmra.mxu0 %v2783
      %v3128 = vpop.f32.mrf.mxu0
      %v3129 = vadd.f32 %v2868, %v3128
      %v3130 = vpop.f32.mrf.mxu0
      %v3131 = vpop.f32.mrf.mxu0
      %v3132 = vadd.f32 %v2868, %v3131
      %v3133 = vpop.f32.mrf.mxu0
      %3134 = vmatprep.mubr.bf16.mxu0 %v2788
      %3135 = vmatmul.mubr.bf16.gmra.mxu0 %v2787
      %v3136 = vpop.f32.mrf.mxu0
      %v3137 = vadd.f32 %v2868, %v3136
      %v3138 = vpop.f32.mrf.mxu0
      %v3139 = vpop.f32.mrf.mxu0
      %v3140 = vadd.f32 %v2868, %v3139
      %v3141 = vpop.f32.mrf.mxu0
      %3142 = vmatprep.mubr.bf16.mxu0 %v2792
      %3143 = vmatmul.mubr.bf16.gmra.mxu0 %v2791
      %v3144 = vpop.f32.mrf.mxu0
      %v3145 = vadd.f32 %v2868, %v3144
      %v3146 = vpop.f32.mrf.mxu0
      %v3147 = vpop.f32.mrf.mxu0
      %v3148 = vadd.f32 %v2868, %v3147
      %v3149 = vpop.f32.mrf.mxu0
      %3150 = vmatprep.mubr.bf16.mxu0 %v2796
      %3151 = vmatmul.mubr.bf16.gmra.mxu0 %v2795
      %v3152 = vpop.f32.mrf.mxu0
      %v3153 = vadd.f32 %v2868, %v3152
      %v3154 = vpop.f32.mrf.mxu0
      %v3155 = vpop.f32.mrf.mxu0
      %v3156 = vadd.f32 %v2868, %v3155
      %v3157 = vpop.f32.mrf.mxu0
      %3158 = vdwg.mxu0
      %3159 = vmatprep.subr.bf16.mxu0 0
      %3160 = vmatpush1.bf16.msra.mxu0 %v3021
      %3161 = vmatprep.subr.bf16.mxu0 0
      %3162 = vmatpush1.bf16.msra.mxu0 %v3020
      %3163 = vmatprep.subr.bf16.mxu0 0
      %3164 = vmatpush1.bf16.msra.mxu0 %v3019
      %3165 = vmatprep.subr.bf16.mxu0 0
      %3166 = vmatpush1.bf16.msra.mxu0 %v3018
      %3167 = vmatprep.subr.bf16.mxu0 0
      %3168 = vmatpush1.bf16.msra.mxu0 %v3017
      %3169 = vmatprep.subr.bf16.mxu0 0
      %3170 = vmatpush1.bf16.msra.mxu0 %v3016
      %3171 = vmatprep.subr.bf16.mxu0 0
      %3172 = vmatpush1.bf16.msra.mxu0 %v3015
      %3173 = vmatprep.subr.bf16.mxu0 0
      %3174 = vmatpush1.bf16.msra.mxu0 %v3014
      %3175 = vmatprep.subr.bf16.mxu0 0
      %3176 = vmatpush2.bf16.msra.mxu0 %v3029
      %3177 = vmatprep.subr.bf16.mxu0 0
      %3178 = vmatpush2.bf16.msra.mxu0 %v3028
      %3179 = vmatprep.subr.bf16.mxu0 0
      %3180 = vmatpush2.bf16.msra.mxu0 %v3027
      %3181 = vmatprep.subr.bf16.mxu0 0
      %3182 = vmatpush2.bf16.msra.mxu0 %v3026
      %3183 = vmatprep.subr.bf16.mxu0 0
      %3184 = vmatpush2.bf16.msra.mxu0 %v3025
      %3185 = vmatprep.subr.bf16.mxu0 0
      %3186 = vmatpush2.bf16.msra.mxu0 %v3024
      %3187 = vmatprep.subr.bf16.mxu0 0
      %3188 = vmatpush2.bf16.msra.mxu0 %v3023
      %3189 = vmatprep.subr.bf16.mxu0 0
      %3190 = vmatpush2.bf16.msra.mxu0 %v3022
      %3191 = vmatprep.mubr.bf16.mxu0 %v2770
      %3192 = vmatmul.mubr.bf16.gmra.mxu0 %v2769
      %v3193 = vpop.f32.mrf.mxu0
      %v3194 = vadd.f32 %v3097, %v3193
      %v3195 = vpop.f32.mrf.mxu0
      %v3196 = vpop.f32.mrf.mxu0
      %v3197 = vadd.f32 %v3100, %v3196
      %v3198 = vpop.f32.mrf.mxu0
      %3199 = vmatprep.mubr.bf16.mxu0 %v2774
      %3200 = vmatmul.mubr.bf16.gmra.mxu0 %v2773
      %v3201 = vpop.f32.mrf.mxu0
      %v3202 = vadd.f32 %v3105, %v3201
      %v3203 = vpop.f32.mrf.mxu0
      %v3204 = vpop.f32.mrf.mxu0
      %v3205 = vadd.f32 %v3108, %v3204
      %v3206 = vpop.f32.mrf.mxu0
      %3207 = vmatprep.mubr.bf16.mxu0 %v2778
      %3208 = vmatmul.mubr.bf16.gmra.mxu0 %v2777
      %v3209 = vpop.f32.mrf.mxu0
      %v3210 = vadd.f32 %v3113, %v3209
      %v3211 = vpop.f32.mrf.mxu0
      %v3212 = vpop.f32.mrf.mxu0
      %v3213 = vadd.f32 %v3116, %v3212
      %v3214 = vpop.f32.mrf.mxu0
      %3215 = vmatprep.mubr.bf16.mxu0 %v2782
      %3216 = vmatmul.mubr.bf16.gmra.mxu0 %v2781
      %v3217 = vpop.f32.mrf.mxu0
      %v3218 = vadd.f32 %v3121, %v3217
      %v3219 = vpop.f32.mrf.mxu0
      %v3220 = vpop.f32.mrf.mxu0
      %v3221 = vadd.f32 %v3124, %v3220
      %v3222 = vpop.f32.mrf.mxu0
      %3223 = vmatprep.mubr.bf16.mxu0 %v2786
      %3224 = vmatmul.mubr.bf16.gmra.mxu0 %v2785
      %v3225 = vpop.f32.mrf.mxu0
      %v3226 = vadd.f32 %v3129, %v3225
      %v3227 = vpop.f32.mrf.mxu0
      %v3228 = vpop.f32.mrf.mxu0
      %v3229 = vadd.f32 %v3132, %v3228
      %v3230 = vpop.f32.mrf.mxu0
      %3231 = vmatprep.mubr.bf16.mxu0 %v2790
      %3232 = vmatmul.mubr.bf16.gmra.mxu0 %v2789
      %v3233 = vpop.f32.mrf.mxu0
      %v3234 = vadd.f32 %v3137, %v3233
      %v3235 = vpop.f32.mrf.mxu0
      %v3236 = vpop.f32.mrf.mxu0
      %v3237 = vadd.f32 %v3140, %v3236
      %v3238 = vpop.f32.mrf.mxu0
      %3239 = vmatprep.mubr.bf16.mxu0 %v2794
      %3240 = vmatmul.mubr.bf16.gmra.mxu0 %v2793
      %v3241 = vpop.f32.mrf.mxu0
      %v3242 = vadd.f32 %v3145, %v3241
      %v3243 = vpop.f32.mrf.mxu0
      %v3244 = vpop.f32.mrf.mxu0
      %v3245 = vadd.f32 %v3148, %v3244
      %v3246 = vpop.f32.mrf.mxu0
      %3247 = vmatprep.mubr.bf16.mxu0 %v2798
      %3248 = vmatmul.mubr.bf16.gmra.mxu0 %v2797
      %v3249 = vpop.f32.mrf.mxu0
      %v3250 = vadd.f32 %v3153, %v3249
      %v3251 = vpop.f32.mrf.mxu0
      %v3252 = vpop.f32.mrf.mxu0
      %v3253 = vadd.f32 %v3156, %v3252
      %v3254 = vpop.f32.mrf.mxu0
      %3255 = vdwg.mxu0
      %3256 = vst [vmem:[%s229] sm:$0xff] %v3194
      %3257 = vst [vmem:[%s229 + $0x8] sm:$0xff] %v3197
      %3258 = vst [vmem:[%s229 + $0x10] sm:$0xff] %v3202
      %3259 = vst [vmem:[%s229 + $0x18] sm:$0xff] %v3205
      %3260 = vst [vmem:[%s229 + $0x20] sm:$0xff] %v3210
      %3261 = vst [vmem:[%s229 + $0x28] sm:$0xff] %v3213
      %3262 = vst [vmem:[%s229 + $0x30] sm:$0xff] %v3218
      %3263 = vst [vmem:[%s229 + $0x38] sm:$0xff] %v3221
      %3264 = vst [vmem:[%s229 + $0x40] sm:$0xff] %v3226
      %3265 = vst [vmem:[%s229 + $0x48] sm:$0xff] %v3229
      %3266 = vst [vmem:[%s229 + $0x50] sm:$0xff] %v3234
      %3267 = vst [vmem:[%s229 + $0x58] sm:$0xff] %v3237
      %3268 = vst [vmem:[%s229 + $0x60] sm:$0xff] %v3242
      %3269 = vst [vmem:[%s229 + $0x68] sm:$0xff] %v3245
      %3270 = vst [vmem:[%s229 + $0x70] sm:$0xff] %v3250
      %3271 = vst [vmem:[%s229 + $0x78] sm:$0xff] %v3253
      %s3272 = smul.u32 16, %s16
      %p3273 = scmp.lt.s32.totalorder %s3272, 31
      %s3274 = scalar_select %p3273, %s3272, 31
      %s3275 = smul.addr %s3274, 8
      %s3276 = scalar_lea.vmem %s5, %s3275
      // Predicated region
      $region41: #{mlp_forward.1} parent=39 // pred_check
        %p3277 = pneg %p144
      $region42: #{mlp_forward.1} parent=39 // pred_check_branch
        %3279 = sbr.rel (%p3277) target = $region44
      $region43: #{mlp_forward.1} parent=39 // pred_region
        %s3280 = smul.u32 16, %s16
      $region44: #{mlp_forward.1} parent=39 // pred_fallthru
        _
    $region40: #{mlp_forward.1} parent=5 // pred_fallthru
      _
    %p3281 = scmp.le.s32.totalorder 2, %s11
    // Predicated region
    $region45: #{mlp_forward.1} parent=5 // pred_check
      %p3282 = pneg %p3281
    $region46: #{mlp_forward.1} parent=5 // pred_check_branch
      %3284 = sbr.rel (%p3282) target = $region48
    $region47: #{mlp_forward.1} parent=5 // pred_region
      %s3285 = ssub.s32 %s11, 2
      // Predicated region
      $region49: #{mlp_forward.1} parent=47 // pred_check
        %p3286 = pneg %p150
      $region50: #{mlp_forward.1} parent=47 // pred_check_branch
        %3288 = sbr.rel (%p3286) target = $region52
      $region51: #{mlp_forward.1} parent=47 // pred_region
        %s3289 = smul.u32 16, %s17
        %p3290 = scmp.lt.s32.totalorder %s3289, 31
        %s3291 = scalar_select %p3290, %s3289, 31
        %s3292 = smul.addr %s3291, 8
        %s3293 = scalar_lea.vmem %s5, %s3292
      $region52: #{mlp_forward.1} parent=47 // pred_fallthru
        _
    $region48: #{mlp_forward.1} parent=5 // pred_fallthru
      _
  $region6: #{mlp_forward.1} parent=0 // loop_footer
    %s15 = sadd.s32 1, %s11
  $region7: #{mlp_forward.1} parent=0 // loop_footer_branch
    %10 = sbr.rel target = $region3
  $region8: #{mlp_forward.1} parent=0 // loop_exit
    _

</llo_original>
